<compile_context>
chip_gen: v7x
topology: tpu7x:2x2x1
jax: 0.10.0
libtpu: 0.0.40
codegen_flags: <defaults>
</compile_context>

<pallas_src>
import jax
import jax.numpy as jnp
from jax.experimental import pallas as pl
from jax.experimental.pallas import tpu as pltpu


def _lstm_kernel(x_ref, wih_ref, whh_ref, b_ref, fcw_ref, fcb_ref,
                 y_ref, hn_ref, cn_ref, hs_scr):
    seq, B, _ = x_ref.shape
    H = whh_ref.shape[0]
    rows = seq * B
    pad_rows = hs_scr.shape[0] - rows

    # Hoist all weight loads out of the serial recurrence.
    wih = wih_ref[...]          # (1, 4H)
    whh = whh_ref[...]          # (H, 4H), resident across timesteps
    bias = b_ref[...]           # (1, 4H)  (= b_ih + b_hh)

    # Zero the padded tail of the hidden-sequence buffer once, so the lane-dense
    # fc output row is well defined (pad columns are sliced off in the wrapper).
    if pad_rows > 0:
        hs_scr[pl.ds(rows, pad_rows), :] = jnp.zeros((pad_rows, H), jnp.float32)

    def step(t, carry):
        h, c = carry
        # Input contribution for this step (input_dim == 1 -> broadcast mul-add).
        # Independent of h -> off the critical chain once the loop is unrolled.
        gx = x_ref[t] * wih + bias                                    # (B, 4H)
        gates = gx + jnp.dot(h, whh, preferred_element_type=jnp.float32)

        # 2 EUP pushes over the full (B, 4H) vreg (i|f|g|o), tanh-based sigmoid.
        sg = 0.5 * jnp.tanh(0.5 * gates) + 0.5      # sigmoid of every gate column
        tg = jnp.tanh(gates)                        # tanh of every gate column
        i_g = sg[:, 0 * H:1 * H]
        f_g = sg[:, 1 * H:2 * H]
        g_g = tg[:, 2 * H:3 * H]
        o_g = sg[:, 3 * H:4 * H]

        c_new = f_g * c + i_g * g_g
        h_new = o_g * jnp.tanh(c_new)               # 3rd (and last) EUP push/step

        # Aligned, unmasked sublane store of this step's hidden state.
        hs_scr[pl.ds(pl.multiple_of(t * B, 8), B), :] = h_new
        return h_new, c_new

    h0 = jnp.zeros((B, H), jnp.float32)
    c0 = jnp.zeros((B, H), jnp.float32)
    h_fin, c_fin = jax.lax.fori_loop(0, seq, step, (h0, c0),
                                     unroll=min(seq, 8))

    hn_ref[...] = h_fin
    cn_ref[...] = c_fin

    # fc projection as ONE MXU matmul over the whole sequence:
    # (1, H) contracted with (rows_pad, H) -> lane-dense (1, rows_pad) row.
    y_ref[...] = jax.lax.dot_general(
        fcw_ref[...], hs_scr[...],
        dimension_numbers=(((1,), (1,)), ((), ())),
        preferred_element_type=jnp.float32) + fcb_ref[0, 0]


@jax.jit
def lstm_forward(inputs, params):
    """Mirror of LSTM.forward: returns (y_pred, (h_n, c_n))."""
    wih, whh, bias, fcw, fcb = params
    batch = inputs.shape[0]
    # Faithful to torch `inputs.view(-1, batch_size, 1)` (raw view, time-major).
    x = inputs.reshape(-1, batch, 1).astype(jnp.float32)
    seq = x.shape[0]
    H = whh.shape[0]

    # Pad batch (sublane dim) up to a multiple of 8 for vreg occupancy.
    b_pad = -(-batch // 8) * 8
    if b_pad != batch:
        x = jnp.pad(x, ((0, 0), (0, b_pad - batch), (0, 0)))

    rows = seq * b_pad
    rows_pad = -(-rows // 128) * 128          # lane-dense fc output length

    y_row, h_n, c_n = pl.pallas_call(
        _lstm_kernel,
        out_shape=(
            jax.ShapeDtypeStruct((1, rows_pad), jnp.float32),   # y (lane-dense row)
            jax.ShapeDtypeStruct((b_pad, H), jnp.float32),      # h_n
            jax.ShapeDtypeStruct((b_pad, H), jnp.float32),      # c_n
        ),
        in_specs=[
            pl.BlockSpec(memory_space=pltpu.MemorySpace.VMEM),  # x (whole sequence)
            pl.BlockSpec(memory_space=pltpu.MemorySpace.VMEM),  # w_ih
            pl.BlockSpec(memory_space=pltpu.MemorySpace.VMEM),  # w_hh (resident)
            pl.BlockSpec(memory_space=pltpu.MemorySpace.VMEM),  # bias
            pl.BlockSpec(memory_space=pltpu.MemorySpace.VMEM),  # fc_w
            pl.BlockSpec(memory_space=pltpu.MemorySpace.SMEM),  # fc_b (scalar path)
        ],
        out_specs=(
            pl.BlockSpec(memory_space=pltpu.MemorySpace.VMEM),
            pl.BlockSpec(memory_space=pltpu.MemorySpace.VMEM),
            pl.BlockSpec(memory_space=pltpu.MemorySpace.VMEM),
        ),
        scratch_shapes=[
            pltpu.VMEM((rows_pad, H), jnp.float32),   # hidden-state sequence buffer
        ],
        compiler_params=pltpu.CompilerParams(
            # Actual scratch/IO footprint is < 256 KiB; 8 MiB leaves ample headroom
            # and fits every generation (v7x physical VMEM is 64 MiB).
            vmem_limit_bytes=8 * 1024 * 1024),
    )(x, wih, whh, bias, fcw, fcb)

    # Undo padding; mirror torch `y_pred.view(batch, -1)` on the (seq, batch, 1) fc out.
    y_sb = y_row[0, :rows].reshape(seq, b_pad)[:, :batch]      # (seq, batch)
    y_pred = y_sb.reshape(batch, seq)
    return y_pred, (h_n[None, :batch, :], c_n[None, :batch, :])


def init_params(key, hidden_dim, input_dim=1, output_dim=1):
    assert input_dim == 1 and output_dim == 1  # forward() hardcodes input_dim=1
    k = jax.random.split(key, 6)
    bound = 1.0 / (hidden_dim ** 0.5)
    wih = jax.random.uniform(k[0], (input_dim, 4 * hidden_dim), jnp.float32, -bound, bound)
    whh = jax.random.uniform(k[1], (hidden_dim, 4 * hidden_dim), jnp.float32, -bound, bound)
    b_ih = jax.random.uniform(k[2], (1, 4 * hidden_dim), jnp.float32, -bound, bound)
    b_hh = jax.random.uniform(k[3], (1, 4 * hidden_dim), jnp.float32, -bound, bound)
    fcw = jax.random.uniform(k[4], (output_dim, hidden_dim), jnp.float32, -bound, bound)
    fcb = jax.random.uniform(k[5], (1, 1), jnp.float32, -bound, bound)
    return (wih, whh, b_ih + b_hh, fcw, fcb)


def _reference(inputs, params):
    """Pure-JAX reference (same math) for a correctness check."""
    wih, whh, bias, fcw, fcb = params
    batch = inputs.shape[0]
    x = inputs.reshape(-1, batch, 1).astype(jnp.float32)
    H = whh.shape[0]

    def step(carry, x_t):
        h, c = carry
        gates = x_t * wih + h @ whh + bias
        i = jax.nn.sigmoid(gates[:, 0 * H:1 * H])
        f = jax.nn.sigmoid(gates[:, 1 * H:2 * H])
        g = jnp.tanh(gates[:, 2 * H:3 * H])
        o = jax.nn.sigmoid(gates[:, 3 * H:4 * H])
        c_new = f * c + i * g
        h_new = o * jnp.tanh(c_new)
        return (h_new, c_new), h_new

    (h_n, c_n), hs = jax.lax.scan(
        step, (jnp.zeros((batch, H)), jnp.zeros((batch, H))), x)
    y = hs @ fcw.T + fcb[0, 0]                 # (seq, batch, 1)
    return y.reshape(batch, -1), (h_n[None], c_n[None])


if __name__ == "__main__":
    hidden_dim, batch, seq = 32, 2, 8
    key = jax.random.PRNGKey(0)
    pkey, xkey = jax.random.split(key)
    params = init_params(pkey, hidden_dim)
    inputs = jax.random.normal(xkey, (batch, seq), dtype=jnp.float32)

    y_pred, (h_n, c_n) = lstm_forward(inputs, params)
    jax.block_until_ready((y_pred, h_n, c_n))

    y_ref, (h_ref, c_ref) = _reference(inputs, params)
    assert y_pred.shape == (batch, seq)
    assert h_n.shape == (1, batch, hidden_dim) and c_n.shape == (1, batch, hidden_dim)
    assert jnp.allclose(y_pred, y_ref, atol=1e-5)
    assert jnp.allclose(h_n, h_ref, atol=1e-5)
    assert jnp.allclose(c_n, c_ref, atol=1e-5)
    print("KERNEL_OK")
</pallas_src>

<mosaic_0001>
module attributes {stable_mosaic.version = 11 : i64} {
  func.func @_lstm_kernel(%arg0: memref<8x8x1xf32, #tpu.memory_space<vmem>>, %arg1: memref<1x128xf32, #tpu.memory_space<vmem>>, %arg2: memref<32x128xf32, #tpu.memory_space<vmem>>, %arg3: memref<1x128xf32, #tpu.memory_space<vmem>>, %arg4: memref<1x32xf32, #tpu.memory_space<vmem>>, %arg5: memref<1x1xf32, #tpu.memory_space<smem>>, %arg6: memref<1x128xf32, #tpu.memory_space<vmem>>, %arg7: memref<8x32xf32, #tpu.memory_space<vmem>>, %arg8: memref<8x32xf32, #tpu.memory_space<vmem>>, %arg9: memref<128x32xf32, #tpu.memory_space<vmem>>) attributes {dimension_semantics = [], scalar_prefetch = 0 : i64, scratch_operands = 1 : i64, tpu.core_type = #tpu.core_type<tc>} {
    %c0 = arith.constant 0 : index
    %c0_0 = arith.constant 0 : index
    %0 = vector.load %arg1[%c0, %c0_0] : memref<1x128xf32, #tpu.memory_space<vmem>>, vector<1x128xf32>
    %c0_1 = arith.constant 0 : index
    %c0_2 = arith.constant 0 : index
    %1 = vector.load %arg2[%c0_1, %c0_2] : memref<32x128xf32, #tpu.memory_space<vmem>>, vector<32x128xf32>
    %c0_3 = arith.constant 0 : index
    %c0_4 = arith.constant 0 : index
    %2 = vector.load %arg3[%c0_3, %c0_4] : memref<1x128xf32, #tpu.memory_space<vmem>>, vector<1x128xf32>
    %cst = arith.constant 0.000000e+00 : f32
    %3 = vector.broadcast %cst : f32 to vector<64x32xf32>
    %c64 = arith.constant 64 : index
    %c0_5 = arith.constant 0 : index
    %4 = vector.load %arg9[%c64, %c0_5] : memref<128x32xf32, #tpu.memory_space<vmem>>, vector<64x32xf32>
    tpu.vector_store %arg9[%c64, %c0_5], %3 {strides = array<i32>} : memref<128x32xf32, #tpu.memory_space<vmem>>, vector<64x32xf32>,
    %cst_6 = arith.constant 0.000000e+00 : f32
    %5 = vector.broadcast %cst_6 : f32 to vector<8x32xf32>
    %cst_7 = arith.constant 0.000000e+00 : f32
    %6 = vector.broadcast %cst_7 : f32 to vector<8x32xf32>
    %c0_i32 = arith.constant 0 : i32
    %7 = arith.index_cast %c0_i32 : i32 to index
    %c0_8 = arith.constant 0 : index
    %c0_9 = arith.constant 0 : index
    %8 = vector.load %arg0[%7, %c0_8, %c0_9] : memref<8x8x1xf32, #tpu.memory_space<vmem>>, vector<1x8x1xf32>
    %9 = vector.shape_cast %8 : vector<1x8x1xf32> to vector<8x1xf32>
    %10 = vector.broadcast %9 : vector<8x1xf32> to vector<8x128xf32>
    %11 = vector.broadcast %0 : vector<1x128xf32> to vector<8x128xf32>
    %12 = arith.mulf %10, %11 : vector<8x128xf32>
    %13 = vector.broadcast %2 : vector<1x128xf32> to vector<8x128xf32>
    %14 = arith.addf %12, %13 : vector<8x128xf32>
    %cst_10 = arith.constant dense<0.000000e+00> : vector<8x128xf32>
    %15 = tpu.matmul %5, %1, %cst_10 {dimension_numbers = #tpu.dot_dimension_numbers<[1], [0], [0], [1], [0, 0, 1, 1], [], []>} : vector<8x32xf32>, vector<32x128xf32>, vector<8x128xf32> -> vector<8x128xf32>
    %16 = arith.addf %14, %15 : vector<8x128xf32>
    %cst_11 = arith.constant 5.000000e-01 : f32
    %17 = vector.broadcast %cst_11 : f32 to vector<8x128xf32>
    %18 = arith.mulf %17, %16 : vector<8x128xf32>
    %19 = math.tanh %18 : vector<8x128xf32>
    %cst_12 = arith.constant 5.000000e-01 : f32
    %20 = vector.broadcast %cst_12 : f32 to vector<8x128xf32>
    %21 = arith.mulf %20, %19 : vector<8x128xf32>
    %cst_13 = arith.constant 5.000000e-01 : f32
    %22 = vector.broadcast %cst_13 : f32 to vector<8x128xf32>
    %23 = arith.addf %21, %22 : vector<8x128xf32>
    %24 = math.tanh %16 : vector<8x128xf32>
    %25 = vector.extract_strided_slice %23 {offsets = [0, 0], sizes = [8, 32], strides = [1, 1]} : vector<8x128xf32> to vector<8x32xf32>
    %26 = vector.extract_strided_slice %23 {offsets = [0, 32], sizes = [8, 32], strides = [1, 1]} : vector<8x128xf32> to vector<8x32xf32>
    %27 = vector.extract_strided_slice %24 {offsets = [0, 64], sizes = [8, 32], strides = [1, 1]} : vector<8x128xf32> to vector<8x32xf32>
    %28 = vector.extract_strided_slice %23 {offsets = [0, 96], sizes = [8, 32], strides = [1, 1]} : vector<8x128xf32> to vector<8x32xf32>
    %29 = arith.mulf %26, %6 : vector<8x32xf32>
    %30 = arith.mulf %25, %27 : vector<8x32xf32>
    %31 = arith.addf %29, %30 : vector<8x32xf32>
    %32 = math.tanh %31 : vector<8x32xf32>
    %33 = arith.mulf %28, %32 : vector<8x32xf32>
    %c8_i32 = arith.constant 8 : i32
    %34 = arith.muli %c0_i32, %c8_i32 : i32
    %35 = tpu.assume_multiple %34, 8 : i32
    %36 = arith.index_cast %35 : i32 to index
    %c0_14 = arith.constant 0 : index
    %37 = vector.load %arg9[%36, %c0_14] : memref<128x32xf32, #tpu.memory_space<vmem>>, vector<8x32xf32>
    tpu.vector_store %arg9[%36, %c0_14], %33 {strides = array<i32>} : memref<128x32xf32, #tpu.memory_space<vmem>>, vector<8x32xf32>,
    %c1_i32 = arith.constant 1 : i32
    %38 = arith.index_cast %c1_i32 : i32 to index
    %c0_15 = arith.constant 0 : index
    %c0_16 = arith.constant 0 : index
    %39 = vector.load %arg0[%38, %c0_15, %c0_16] : memref<8x8x1xf32, #tpu.memory_space<vmem>>, vector<1x8x1xf32>
    %40 = vector.shape_cast %39 : vector<1x8x1xf32> to vector<8x1xf32>
    %41 = vector.broadcast %40 : vector<8x1xf32> to vector<8x128xf32>
    %42 = vector.broadcast %0 : vector<1x128xf32> to vector<8x128xf32>
    %43 = arith.mulf %41, %42 : vector<8x128xf32>
    %44 = vector.broadcast %2 : vector<1x128xf32> to vector<8x128xf32>
    %45 = arith.addf %43, %44 : vector<8x128xf32>
    %cst_17 = arith.constant dense<0.000000e+00> : vector<8x128xf32>
    %46 = tpu.matmul %33, %1, %cst_17 {dimension_numbers = #tpu.dot_dimension_numbers<[1], [0], [0], [1], [0, 0, 1, 1], [], []>} : vector<8x32xf32>, vector<32x128xf32>, vector<8x128xf32> -> vector<8x128xf32>
    %47 = arith.addf %45, %46 : vector<8x128xf32>
    %cst_18 = arith.constant 5.000000e-01 : f32
    %48 = vector.broadcast %cst_18 : f32 to vector<8x128xf32>
    %49 = arith.mulf %48, %47 : vector<8x128xf32>
    %50 = math.tanh %49 : vector<8x128xf32>
    %cst_19 = arith.constant 5.000000e-01 : f32
    %51 = vector.broadcast %cst_19 : f32 to vector<8x128xf32>
    %52 = arith.mulf %51, %50 : vector<8x128xf32>
    %cst_20 = arith.constant 5.000000e-01 : f32
    %53 = vector.broadcast %cst_20 : f32 to vector<8x128xf32>
    %54 = arith.addf %52, %53 : vector<8x128xf32>
    %55 = math.tanh %47 : vector<8x128xf32>
    %56 = vector.extract_strided_slice %54 {offsets = [0, 0], sizes = [8, 32], strides = [1, 1]} : vector<8x128xf32> to vector<8x32xf32>
    %57 = vector.extract_strided_slice %54 {offsets = [0, 32], sizes = [8, 32], strides = [1, 1]} : vector<8x128xf32> to vector<8x32xf32>
    %58 = vector.extract_strided_slice %55 {offsets = [0, 64], sizes = [8, 32], strides = [1, 1]} : vector<8x128xf32> to vector<8x32xf32>
    %59 = vector.extract_strided_slice %54 {offsets = [0, 96], sizes = [8, 32], strides = [1, 1]} : vector<8x128xf32> to vector<8x32xf32>
    %60 = arith.mulf %57, %31 : vector<8x32xf32>
    %61 = arith.mulf %56, %58 : vector<8x32xf32>
    %62 = arith.addf %60, %61 : vector<8x32xf32>
    %63 = math.tanh %62 : vector<8x32xf32>
    %64 = arith.mulf %59, %63 : vector<8x32xf32>
    %c8_i32_21 = arith.constant 8 : i32
    %65 = arith.muli %c1_i32, %c8_i32_21 : i32
    %66 = tpu.assume_multiple %65, 8 : i32
    %67 = arith.index_cast %66 : i32 to index
    %c0_22 = arith.constant 0 : index
    %68 = vector.load %arg9[%67, %c0_22] : memref<128x32xf32, #tpu.memory_space<vmem>>, vector<8x32xf32>
    tpu.vector_store %arg9[%67, %c0_22], %64 {strides = array<i32>} : memref<128x32xf32, #tpu.memory_space<vmem>>, vector<8x32xf32>,
    %c2_i32 = arith.constant 2 : i32
    %69 = arith.index_cast %c2_i32 : i32 to index
    %c0_23 = arith.constant 0 : index
    %c0_24 = arith.constant 0 : index
    %70 = vector.load %arg0[%69, %c0_23, %c0_24] : memref<8x8x1xf32, #tpu.memory_space<vmem>>, vector<1x8x1xf32>
    %71 = vector.shape_cast %70 : vector<1x8x1xf32> to vector<8x1xf32>
    %72 = vector.broadcast %71 : vector<8x1xf32> to vector<8x128xf32>
    %73 = vector.broadcast %0 : vector<1x128xf32> to vector<8x128xf32>
    %74 = arith.mulf %72, %73 : vector<8x128xf32>
    %75 = vector.broadcast %2 : vector<1x128xf32> to vector<8x128xf32>
    %76 = arith.addf %74, %75 : vector<8x128xf32>
    %cst_25 = arith.constant dense<0.000000e+00> : vector<8x128xf32>
    %77 = tpu.matmul %64, %1, %cst_25 {dimension_numbers = #tpu.dot_dimension_numbers<[1], [0], [0], [1], [0, 0, 1, 1], [], []>} : vector<8x32xf32>, vector<32x128xf32>, vector<8x128xf32> -> vector<8x128xf32>
    %78 = arith.addf %76, %77 : vector<8x128xf32>
    %cst_26 = arith.constant 5.000000e-01 : f32
    %79 = vector.broadcast %cst_26 : f32 to vector<8x128xf32>
    %80 = arith.mulf %79, %78 : vector<8x128xf32>
    %81 = math.tanh %80 : vector<8x128xf32>
    %cst_27 = arith.constant 5.000000e-01 : f32
    %82 = vector.broadcast %cst_27 : f32 to vector<8x128xf32>
    %83 = arith.mulf %82, %81 : vector<8x128xf32>
    %cst_28 = arith.constant 5.000000e-01 : f32
    %84 = vector.broadcast %cst_28 : f32 to vector<8x128xf32>
    %85 = arith.addf %83, %84 : vector<8x128xf32>
    %86 = math.tanh %78 : vector<8x128xf32>
    %87 = vector.extract_strided_slice %85 {offsets = [0, 0], sizes = [8, 32], strides = [1, 1]} : vector<8x128xf32> to vector<8x32xf32>
    %88 = vector.extract_strided_slice %85 {offsets = [0, 32], sizes = [8, 32], strides = [1, 1]} : vector<8x128xf32> to vector<8x32xf32>
    %89 = vector.extract_strided_slice %86 {offsets = [0, 64], sizes = [8, 32], strides = [1, 1]} : vector<8x128xf32> to vector<8x32xf32>
    %90 = vector.extract_strided_slice %85 {offsets = [0, 96], sizes = [8, 32], strides = [1, 1]} : vector<8x128xf32> to vector<8x32xf32>
    %91 = arith.mulf %88, %62 : vector<8x32xf32>
    %92 = arith.mulf %87, %89 : vector<8x32xf32>
    %93 = arith.addf %91, %92 : vector<8x32xf32>
    %94 = math.tanh %93 : vector<8x32xf32>
    %95 = arith.mulf %90, %94 : vector<8x32xf32>
    %c8_i32_29 = arith.constant 8 : i32
    %96 = arith.muli %c2_i32, %c8_i32_29 : i32
    %97 = tpu.assume_multiple %96, 8 : i32
    %98 = arith.index_cast %97 : i32 to index
    %c0_30 = arith.constant 0 : index
    %99 = vector.load %arg9[%98, %c0_30] : memref<128x32xf32, #tpu.memory_space<vmem>>, vector<8x32xf32>
    tpu.vector_store %arg9[%98, %c0_30], %95 {strides = array<i32>} : memref<128x32xf32, #tpu.memory_space<vmem>>, vector<8x32xf32>,
    %c3_i32 = arith.constant 3 : i32
    %100 = arith.index_cast %c3_i32 : i32 to index
    %c0_31 = arith.constant 0 : index
    %c0_32 = arith.constant 0 : index
    %101 = vector.load %arg0[%100, %c0_31, %c0_32] : memref<8x8x1xf32, #tpu.memory_space<vmem>>, vector<1x8x1xf32>
    %102 = vector.shape_cast %101 : vector<1x8x1xf32> to vector<8x1xf32>
    %103 = vector.broadcast %102 : vector<8x1xf32> to vector<8x128xf32>
    %104 = vector.broadcast %0 : vector<1x128xf32> to vector<8x128xf32>
    %105 = arith.mulf %103, %104 : vector<8x128xf32>
    %106 = vector.broadcast %2 : vector<1x128xf32> to vector<8x128xf32>
    %107 = arith.addf %105, %106 : vector<8x128xf32>
    %cst_33 = arith.constant dense<0.000000e+00> : vector<8x128xf32>
    %108 = tpu.matmul %95, %1, %cst_33 {dimension_numbers = #tpu.dot_dimension_numbers<[1], [0], [0], [1], [0, 0, 1, 1], [], []>} : vector<8x32xf32>, vector<32x128xf32>, vector<8x128xf32> -> vector<8x128xf32>
    %109 = arith.addf %107, %108 : vector<8x128xf32>
    %cst_34 = arith.constant 5.000000e-01 : f32
    %110 = vector.broadcast %cst_34 : f32 to vector<8x128xf32>
    %111 = arith.mulf %110, %109 : vector<8x128xf32>
    %112 = math.tanh %111 : vector<8x128xf32>
    %cst_35 = arith.constant 5.000000e-01 : f32
    %113 = vector.broadcast %cst_35 : f32 to vector<8x128xf32>
    %114 = arith.mulf %113, %112 : vector<8x128xf32>
    %cst_36 = arith.constant 5.000000e-01 : f32
    %115 = vector.broadcast %cst_36 : f32 to vector<8x128xf32>
    %116 = arith.addf %114, %115 : vector<8x128xf32>
    %117 = math.tanh %109 : vector<8x128xf32>
    %118 = vector.extract_strided_slice %116 {offsets = [0, 0], sizes = [8, 32], strides = [1, 1]} : vector<8x128xf32> to vector<8x32xf32>
    %119 = vector.extract_strided_slice %116 {offsets = [0, 32], sizes = [8, 32], strides = [1, 1]} : vector<8x128xf32> to vector<8x32xf32>
    %120 = vector.extract_strided_slice %117 {offsets = [0, 64], sizes = [8, 32], strides = [1, 1]} : vector<8x128xf32> to vector<8x32xf32>
    %121 = vector.extract_strided_slice %116 {offsets = [0, 96], sizes = [8, 32], strides = [1, 1]} : vector<8x128xf32> to vector<8x32xf32>
    %122 = arith.mulf %119, %93 : vector<8x32xf32>
    %123 = arith.mulf %118, %120 : vector<8x32xf32>
    %124 = arith.addf %122, %123 : vector<8x32xf32>
    %125 = math.tanh %124 : vector<8x32xf32>
    %126 = arith.mulf %121, %125 : vector<8x32xf32>
    %c8_i32_37 = arith.constant 8 : i32
    %127 = arith.muli %c3_i32, %c8_i32_37 : i32
    %128 = tpu.assume_multiple %127, 8 : i32
    %129 = arith.index_cast %128 : i32 to index
    %c0_38 = arith.constant 0 : index
    %130 = vector.load %arg9[%129, %c0_38] : memref<128x32xf32, #tpu.memory_space<vmem>>, vector<8x32xf32>
    tpu.vector_store %arg9[%129, %c0_38], %126 {strides = array<i32>} : memref<128x32xf32, #tpu.memory_space<vmem>>, vector<8x32xf32>,
    %c4_i32 = arith.constant 4 : i32
    %131 = arith.index_cast %c4_i32 : i32 to index
    %c0_39 = arith.constant 0 : index
    %c0_40 = arith.constant 0 : index
    %132 = vector.load %arg0[%131, %c0_39, %c0_40] : memref<8x8x1xf32, #tpu.memory_space<vmem>>, vector<1x8x1xf32>
    %133 = vector.shape_cast %132 : vector<1x8x1xf32> to vector<8x1xf32>
    %134 = vector.broadcast %133 : vector<8x1xf32> to vector<8x128xf32>
    %135 = vector.broadcast %0 : vector<1x128xf32> to vector<8x128xf32>
    %136 = arith.mulf %134, %135 : vector<8x128xf32>
    %137 = vector.broadcast %2 : vector<1x128xf32> to vector<8x128xf32>
    %138 = arith.addf %136, %137 : vector<8x128xf32>
    %cst_41 = arith.constant dense<0.000000e+00> : vector<8x128xf32>
    %139 = tpu.matmul %126, %1, %cst_41 {dimension_numbers = #tpu.dot_dimension_numbers<[1], [0], [0], [1], [0, 0, 1, 1], [], []>} : vector<8x32xf32>, vector<32x128xf32>, vector<8x128xf32> -> vector<8x128xf32>
    %140 = arith.addf %138, %139 : vector<8x128xf32>
    %cst_42 = arith.constant 5.000000e-01 : f32
    %141 = vector.broadcast %cst_42 : f32 to vector<8x128xf32>
    %142 = arith.mulf %141, %140 : vector<8x128xf32>
    %143 = math.tanh %142 : vector<8x128xf32>
    %cst_43 = arith.constant 5.000000e-01 : f32
    %144 = vector.broadcast %cst_43 : f32 to vector<8x128xf32>
    %145 = arith.mulf %144, %143 : vector<8x128xf32>
    %cst_44 = arith.constant 5.000000e-01 : f32
    %146 = vector.broadcast %cst_44 : f32 to vector<8x128xf32>
    %147 = arith.addf %145, %146 : vector<8x128xf32>
    %148 = math.tanh %140 : vector<8x128xf32>
    %149 = vector.extract_strided_slice %147 {offsets = [0, 0], sizes = [8, 32], strides = [1, 1]} : vector<8x128xf32> to vector<8x32xf32>
    %150 = vector.extract_strided_slice %147 {offsets = [0, 32], sizes = [8, 32], strides = [1, 1]} : vector<8x128xf32> to vector<8x32xf32>
    %151 = vector.extract_strided_slice %148 {offsets = [0, 64], sizes = [8, 32], strides = [1, 1]} : vector<8x128xf32> to vector<8x32xf32>
    %152 = vector.extract_strided_slice %147 {offsets = [0, 96], sizes = [8, 32], strides = [1, 1]} : vector<8x128xf32> to vector<8x32xf32>
    %153 = arith.mulf %150, %124 : vector<8x32xf32>
    %154 = arith.mulf %149, %151 : vector<8x32xf32>
    %155 = arith.addf %153, %154 : vector<8x32xf32>
    %156 = math.tanh %155 : vector<8x32xf32>
    %157 = arith.mulf %152, %156 : vector<8x32xf32>
    %c8_i32_45 = arith.constant 8 : i32
    %158 = arith.muli %c4_i32, %c8_i32_45 : i32
    %159 = tpu.assume_multiple %158, 8 : i32
    %160 = arith.index_cast %159 : i32 to index
    %c0_46 = arith.constant 0 : index
    %161 = vector.load %arg9[%160, %c0_46] : memref<128x32xf32, #tpu.memory_space<vmem>>, vector<8x32xf32>
    tpu.vector_store %arg9[%160, %c0_46], %157 {strides = array<i32>} : memref<128x32xf32, #tpu.memory_space<vmem>>, vector<8x32xf32>,
    %c5_i32 = arith.constant 5 : i32
    %162 = arith.index_cast %c5_i32 : i32 to index
    %c0_47 = arith.constant 0 : index
    %c0_48 = arith.constant 0 : index
    %163 = vector.load %arg0[%162, %c0_47, %c0_48] : memref<8x8x1xf32, #tpu.memory_space<vmem>>, vector<1x8x1xf32>
    %164 = vector.shape_cast %163 : vector<1x8x1xf32> to vector<8x1xf32>
    %165 = vector.broadcast %164 : vector<8x1xf32> to vector<8x128xf32>
    %166 = vector.broadcast %0 : vector<1x128xf32> to vector<8x128xf32>
    %167 = arith.mulf %165, %166 : vector<8x128xf32>
    %168 = vector.broadcast %2 : vector<1x128xf32> to vector<8x128xf32>
    %169 = arith.addf %167, %168 : vector<8x128xf32>
    %cst_49 = arith.constant dense<0.000000e+00> : vector<8x128xf32>
    %170 = tpu.matmul %157, %1, %cst_49 {dimension_numbers = #tpu.dot_dimension_numbers<[1], [0], [0], [1], [0, 0, 1, 1], [], []>} : vector<8x32xf32>, vector<32x128xf32>, vector<8x128xf32> -> vector<8x128xf32>
    %171 = arith.addf %169, %170 : vector<8x128xf32>
    %cst_50 = arith.constant 5.000000e-01 : f32
    %172 = vector.broadcast %cst_50 : f32 to vector<8x128xf32>
    %173 = arith.mulf %172, %171 : vector<8x128xf32>
    %174 = math.tanh %173 : vector<8x128xf32>
    %cst_51 = arith.constant 5.000000e-01 : f32
    %175 = vector.broadcast %cst_51 : f32 to vector<8x128xf32>
    %176 = arith.mulf %175, %174 : vector<8x128xf32>
    %cst_52 = arith.constant 5.000000e-01 : f32
    %177 = vector.broadcast %cst_52 : f32 to vector<8x128xf32>
    %178 = arith.addf %176, %177 : vector<8x128xf32>
    %179 = math.tanh %171 : vector<8x128xf32>
    %180 = vector.extract_strided_slice %178 {offsets = [0, 0], sizes = [8, 32], strides = [1, 1]} : vector<8x128xf32> to vector<8x32xf32>
    %181 = vector.extract_strided_slice %178 {offsets = [0, 32], sizes = [8, 32], strides = [1, 1]} : vector<8x128xf32> to vector<8x32xf32>
    %182 = vector.extract_strided_slice %179 {offsets = [0, 64], sizes = [8, 32], strides = [1, 1]} : vector<8x128xf32> to vector<8x32xf32>
    %183 = vector.extract_strided_slice %178 {offsets = [0, 96], sizes = [8, 32], strides = [1, 1]} : vector<8x128xf32> to vector<8x32xf32>
    %184 = arith.mulf %181, %155 : vector<8x32xf32>
    %185 = arith.mulf %180, %182 : vector<8x32xf32>
    %186 = arith.addf %184, %185 : vector<8x32xf32>
    %187 = math.tanh %186 : vector<8x32xf32>
    %188 = arith.mulf %183, %187 : vector<8x32xf32>
    %c8_i32_53 = arith.constant 8 : i32
    %189 = arith.muli %c5_i32, %c8_i32_53 : i32
    %190 = tpu.assume_multiple %189, 8 : i32
    %191 = arith.index_cast %190 : i32 to index
    %c0_54 = arith.constant 0 : index
    %192 = vector.load %arg9[%191, %c0_54] : memref<128x32xf32, #tpu.memory_space<vmem>>, vector<8x32xf32>
    tpu.vector_store %arg9[%191, %c0_54], %188 {strides = array<i32>} : memref<128x32xf32, #tpu.memory_space<vmem>>, vector<8x32xf32>,
    %c6_i32 = arith.constant 6 : i32
    %193 = arith.index_cast %c6_i32 : i32 to index
    %c0_55 = arith.constant 0 : index
    %c0_56 = arith.constant 0 : index
    %194 = vector.load %arg0[%193, %c0_55, %c0_56] : memref<8x8x1xf32, #tpu.memory_space<vmem>>, vector<1x8x1xf32>
    %195 = vector.shape_cast %194 : vector<1x8x1xf32> to vector<8x1xf32>
    %196 = vector.broadcast %195 : vector<8x1xf32> to vector<8x128xf32>
    %197 = vector.broadcast %0 : vector<1x128xf32> to vector<8x128xf32>
    %198 = arith.mulf %196, %197 : vector<8x128xf32>
    %199 = vector.broadcast %2 : vector<1x128xf32> to vector<8x128xf32>
    %200 = arith.addf %198, %199 : vector<8x128xf32>
    %cst_57 = arith.constant dense<0.000000e+00> : vector<8x128xf32>
    %201 = tpu.matmul %188, %1, %cst_57 {dimension_numbers = #tpu.dot_dimension_numbers<[1], [0], [0], [1], [0, 0, 1, 1], [], []>} : vector<8x32xf32>, vector<32x128xf32>, vector<8x128xf32> -> vector<8x128xf32>
    %202 = arith.addf %200, %201 : vector<8x128xf32>
    %cst_58 = arith.constant 5.000000e-01 : f32
    %203 = vector.broadcast %cst_58 : f32 to vector<8x128xf32>
    %204 = arith.mulf %203, %202 : vector<8x128xf32>
    %205 = math.tanh %204 : vector<8x128xf32>
    %cst_59 = arith.constant 5.000000e-01 : f32
    %206 = vector.broadcast %cst_59 : f32 to vector<8x128xf32>
    %207 = arith.mulf %206, %205 : vector<8x128xf32>
    %cst_60 = arith.constant 5.000000e-01 : f32
    %208 = vector.broadcast %cst_60 : f32 to vector<8x128xf32>
    %209 = arith.addf %207, %208 : vector<8x128xf32>
    %210 = math.tanh %202 : vector<8x128xf32>
    %211 = vector.extract_strided_slice %209 {offsets = [0, 0], sizes = [8, 32], strides = [1, 1]} : vector<8x128xf32> to vector<8x32xf32>
    %212 = vector.extract_strided_slice %209 {offsets = [0, 32], sizes = [8, 32], strides = [1, 1]} : vector<8x128xf32> to vector<8x32xf32>
    %213 = vector.extract_strided_slice %210 {offsets = [0, 64], sizes = [8, 32], strides = [1, 1]} : vector<8x128xf32> to vector<8x32xf32>
    %214 = vector.extract_strided_slice %209 {offsets = [0, 96], sizes = [8, 32], strides = [1, 1]} : vector<8x128xf32> to vector<8x32xf32>
    %215 = arith.mulf %212, %186 : vector<8x32xf32>
    %216 = arith.mulf %211, %213 : vector<8x32xf32>
    %217 = arith.addf %215, %216 : vector<8x32xf32>
    %218 = math.tanh %217 : vector<8x32xf32>
    %219 = arith.mulf %214, %218 : vector<8x32xf32>
    %c8_i32_61 = arith.constant 8 : i32
    %220 = arith.muli %c6_i32, %c8_i32_61 : i32
    %221 = tpu.assume_multiple %220, 8 : i32
    %222 = arith.index_cast %221 : i32 to index
    %c0_62 = arith.constant 0 : index
    %223 = vector.load %arg9[%222, %c0_62] : memref<128x32xf32, #tpu.memory_space<vmem>>, vector<8x32xf32>
    tpu.vector_store %arg9[%222, %c0_62], %219 {strides = array<i32>} : memref<128x32xf32, #tpu.memory_space<vmem>>, vector<8x32xf32>,
    %c7_i32 = arith.constant 7 : i32
    %224 = arith.index_cast %c7_i32 : i32 to index
    %c0_63 = arith.constant 0 : index
    %c0_64 = arith.constant 0 : index
    %225 = vector.load %arg0[%224, %c0_63, %c0_64] : memref<8x8x1xf32, #tpu.memory_space<vmem>>, vector<1x8x1xf32>
    %226 = vector.shape_cast %225 : vector<1x8x1xf32> to vector<8x1xf32>
    %227 = vector.broadcast %226 : vector<8x1xf32> to vector<8x128xf32>
    %228 = vector.broadcast %0 : vector<1x128xf32> to vector<8x128xf32>
    %229 = arith.mulf %227, %228 : vector<8x128xf32>
    %230 = vector.broadcast %2 : vector<1x128xf32> to vector<8x128xf32>
    %231 = arith.addf %229, %230 : vector<8x128xf32>
    %cst_65 = arith.constant dense<0.000000e+00> : vector<8x128xf32>
    %232 = tpu.matmul %219, %1, %cst_65 {dimension_numbers = #tpu.dot_dimension_numbers<[1], [0], [0], [1], [0, 0, 1, 1], [], []>} : vector<8x32xf32>, vector<32x128xf32>, vector<8x128xf32> -> vector<8x128xf32>
    %233 = arith.addf %231, %232 : vector<8x128xf32>
    %cst_66 = arith.constant 5.000000e-01 : f32
    %234 = vector.broadcast %cst_66 : f32 to vector<8x128xf32>
    %235 = arith.mulf %234, %233 : vector<8x128xf32>
    %236 = math.tanh %235 : vector<8x128xf32>
    %cst_67 = arith.constant 5.000000e-01 : f32
    %237 = vector.broadcast %cst_67 : f32 to vector<8x128xf32>
    %238 = arith.mulf %237, %236 : vector<8x128xf32>
    %cst_68 = arith.constant 5.000000e-01 : f32
    %239 = vector.broadcast %cst_68 : f32 to vector<8x128xf32>
    %240 = arith.addf %238, %239 : vector<8x128xf32>
    %241 = math.tanh %233 : vector<8x128xf32>
    %242 = vector.extract_strided_slice %240 {offsets = [0, 0], sizes = [8, 32], strides = [1, 1]} : vector<8x128xf32> to vector<8x32xf32>
    %243 = vector.extract_strided_slice %240 {offsets = [0, 32], sizes = [8, 32], strides = [1, 1]} : vector<8x128xf32> to vector<8x32xf32>
    %244 = vector.extract_strided_slice %241 {offsets = [0, 64], sizes = [8, 32], strides = [1, 1]} : vector<8x128xf32> to vector<8x32xf32>
    %245 = vector.extract_strided_slice %240 {offsets = [0, 96], sizes = [8, 32], strides = [1, 1]} : vector<8x128xf32> to vector<8x32xf32>
    %246 = arith.mulf %243, %217 : vector<8x32xf32>
    %247 = arith.mulf %242, %244 : vector<8x32xf32>
    %248 = arith.addf %246, %247 : vector<8x32xf32>
    %249 = math.tanh %248 : vector<8x32xf32>
    %250 = arith.mulf %245, %249 : vector<8x32xf32>
    %c8_i32_69 = arith.constant 8 : i32
    %251 = arith.muli %c7_i32, %c8_i32_69 : i32
    %252 = tpu.assume_multiple %251, 8 : i32
    %253 = arith.index_cast %252 : i32 to index
    %c0_70 = arith.constant 0 : index
    %254 = vector.load %arg9[%253, %c0_70] : memref<128x32xf32, #tpu.memory_space<vmem>>, vector<8x32xf32>
    tpu.vector_store %arg9[%253, %c0_70], %250 {strides = array<i32>} : memref<128x32xf32, #tpu.memory_space<vmem>>, vector<8x32xf32>,
    %c8_i32_71 = arith.constant 8 : i32
    %c0_72 = arith.constant 0 : index
    %c0_73 = arith.constant 0 : index
    %255 = vector.load %arg7[%c0_72, %c0_73] : memref<8x32xf32, #tpu.memory_space<vmem>>, vector<8x32xf32>
    tpu.vector_store %arg7[%c0_72, %c0_73], %250 {strides = array<i32>} : memref<8x32xf32, #tpu.memory_space<vmem>>, vector<8x32xf32>,
    %c0_74 = arith.constant 0 : index
    %c0_75 = arith.constant 0 : index
    %256 = vector.load %arg8[%c0_74, %c0_75] : memref<8x32xf32, #tpu.memory_space<vmem>>, vector<8x32xf32>
    tpu.vector_store %arg8[%c0_74, %c0_75], %248 {strides = array<i32>} : memref<8x32xf32, #tpu.memory_space<vmem>>, vector<8x32xf32>,
    %c0_76 = arith.constant 0 : index
    %c0_77 = arith.constant 0 : index
    %257 = vector.load %arg4[%c0_76, %c0_77] : memref<1x32xf32, #tpu.memory_space<vmem>>, vector<1x32xf32>
    %c0_78 = arith.constant 0 : index
    %c0_79 = arith.constant 0 : index
    %258 = vector.load %arg9[%c0_78, %c0_79] : memref<128x32xf32, #tpu.memory_space<vmem>>, vector<128x32xf32>
    %cst_80 = arith.constant dense<0.000000e+00> : vector<1x128xf32>
    %259 = tpu.matmul %257, %258, %cst_80 {dimension_numbers = #tpu.dot_dimension_numbers<[1], [1], [0], [0], [0, 0, 1, 0], [], []>} : vector<1x32xf32>, vector<128x32xf32>, vector<1x128xf32> -> vector<1x128xf32>
    %c0_81 = arith.constant 0 : index
    %c0_82 = arith.constant 0 : index
    %260 = memref.load %arg5[%c0_81, %c0_82] : memref<1x1xf32, #tpu.memory_space<smem>>
    %261 = vector.broadcast %260 : f32 to vector<1x128xf32>
    %262 = arith.addf %259, %261 : vector<1x128xf32>
    %c0_83 = arith.constant 0 : index
    %c0_84 = arith.constant 0 : index
    %263 = vector.load %arg6[%c0_83, %c0_84] : memref<1x128xf32, #tpu.memory_space<vmem>>, vector<1x128xf32>
    tpu.vector_store %arg6[%c0_83, %c0_84], %262 {strides = array<i32>} : memref<1x128xf32, #tpu.memory_space<vmem>>, vector<1x128xf32>,
    return
  }
}

</mosaic_0001>

<llo_original>
// kernel: squeeze.1
$region0: #{squeeze.1}
  %s0 = inlined_call_operand.vmem [shape: f32[64], index: 0, kind: input, shape index: {}]
  %s1 = inlined_call_operand.vmem [shape: f32[8,8], index: 1, kind: output, shape index: {}]
  $region1: #{squeeze.1} parent=0
    #allocation0 [shape = 'u8[4096]{0}', space=vmem, size = 0x1000, scoped, tag = 'scoped mem for input reshape']
    %s3 = sshllo.u32 0, 1
    %v4 = vld [vmem:[%s0] sm:%s3]
    %5 = vst [vmem:[#allocation0] sm:%s3] %v4
    %v6 = vld [vmem:[#allocation0] sm:$0x1]
    %vm7 = vcmask 64512
    %8 = vst.msk [vmem:[%s1] sm:$0x1] %vm7, %v6
    %v9 = vld [vmem:[#allocation0] sm:$0x1]
    %10 = vrot.lane.b32.xlu0 %v9, 120
    %v11 = vpop.permute.xlu0 %10
    %vm12 = vcmask 64512
    %s13 = scalar_lea.vmem %s1, 1
    %14 = vst.msk [vmem:[%s13] sm:$0x1] %vm12, %v11
    %v15 = vld [vmem:[#allocation0] sm:$0x1]
    %16 = vrot.lane.b32.xlu0 %v15, 112
    %v17 = vpop.permute.xlu0 %16
    %vm18 = vcmask 64512
    %s19 = scalar_lea.vmem %s1, 2
    %20 = vst.msk [vmem:[%s19] sm:$0x1] %vm18, %v17
    %v21 = vld [vmem:[#allocation0] sm:$0x1]
    %22 = vrot.lane.b32.xlu0 %v21, 104
    %v23 = vpop.permute.xlu0 %22
    %vm24 = vcmask 64512
    %s25 = scalar_lea.vmem %s1, 3
    %26 = vst.msk [vmem:[%s25] sm:$0x1] %vm24, %v23
    %v27 = vld [vmem:[#allocation0] sm:$0x1]
    %28 = vrot.lane.b32.xlu0 %v27, 96
    %v29 = vpop.permute.xlu0 %28
    %vm30 = vcmask 64512
    %s31 = scalar_lea.vmem %s1, 4
    %32 = vst.msk [vmem:[%s31] sm:$0x1] %vm30, %v29
    %v33 = vld [vmem:[#allocation0] sm:$0x1]
    %34 = vrot.lane.b32.xlu0 %v33, 88
    %v35 = vpop.permute.xlu0 %34
    %vm36 = vcmask 64512
    %s37 = scalar_lea.vmem %s1, 5
    %38 = vst.msk [vmem:[%s37] sm:$0x1] %vm36, %v35
    %v39 = vld [vmem:[#allocation0] sm:$0x1]
    %40 = vrot.lane.b32.xlu0 %v39, 80
    %v41 = vpop.permute.xlu0 %40
    %vm42 = vcmask 64512
    %s43 = scalar_lea.vmem %s1, 6
    %44 = vst.msk [vmem:[%s43] sm:$0x1] %vm42, %v41
    %v45 = vld [vmem:[#allocation0] sm:$0x1]
    %46 = vrot.lane.b32.xlu0 %v45, 72
    %v47 = vpop.permute.xlu0 %46
    %vm48 = vcmask 64512
    %s49 = scalar_lea.vmem %s1, 7
    %50 = vst.msk [vmem:[%s49] sm:$0x1] %vm48, %v47

// kernel: lstm_forward.1
$region0: #{lstm_forward.1}
  #allocation0 [shape = 'u32[]', space=smem, size = 0x4, offset = 0x4, fixed_abs, tag = 'smem constant byte address 0x4 - core index']
  #allocation1 [shape = 'u32[144,128]{1,0:T(1,128)}', space=vmem, size = 0x12000, scoped, tag = 'internal scratch']
  #allocation2 [shape = 'f32[128,32]{1,0:T(8,128)}', space=vmem, size = 0x10000, scoped, tag = 'scratch operand']
  #allocation3 [shape = 'f32[1,1]{1,0:T(1,128)S(6)}', space=smem, size = 0x200, scoped, tag = 'scoped memory for lstm_forward.1']
  %s0 = inlined_call_operand.vmem [shape: f32[8,8,1], index: 0, kind: input, shape index: {}]
  %s1 = inlined_call_operand.vmem [shape: f32[1,128], index: 1, kind: input, shape index: {}]
  %s2 = inlined_call_operand.vmem [shape: f32[32,128], index: 2, kind: input, shape index: {}]
  %s3 = inlined_call_operand.vmem [shape: f32[1,128], index: 3, kind: input, shape index: {}]
  %s4 = inlined_call_operand.vmem [shape: f32[1,32], index: 4, kind: input, shape index: {}]
  %s5 = inlined_call_operand.<no memory space> [shape: f32[1,1], index: 5, kind: input, shape index: {}]
  %s6 = inlined_call_operand.vmem [shape: f32[1,128], index: 6, kind: output, shape index: {0}]
  %s7 = inlined_call_operand.vmem [shape: f32[8,32], index: 7, kind: output, shape index: {1}]
  %s8 = inlined_call_operand.vmem [shape: f32[8,32], index: 8, kind: output, shape index: {2}]
  %9 = xla_tuple %s6, %s7, %s8
  %s10 = sld [smem:[#allocation0]]
  $region50: #{lstm_forward.1} parent=0
    _
  %s12 = ssub.s32 1, %s10
  %s13 = scalar_select 0, %s12, %s10
  %14 = sst [smem:[#allocation3]] %s5
  // Predicated region
  $region2: #{lstm_forward.1} parent=0 // pred_check
    _
  $region3: #{lstm_forward.1} parent=0 // pred_check_branch
    %16 = sbr.rel (0) target = $region5
  $region4: #{lstm_forward.1} parent=0 // pred_region
    _
  $region5: #{lstm_forward.1} parent=0 // pred_fallthru
    _
  // Predicated region
  $region6: #{lstm_forward.1} parent=0 // pred_check
    _
  $region7: #{lstm_forward.1} parent=0 // pred_check_branch
    %18 = sbr.rel (0) target = $region9
  $region8: #{lstm_forward.1} parent=0 // pred_region
    _
  $region9: #{lstm_forward.1} parent=0 // pred_fallthru
    _
  // Predicated region
  $region10: #{lstm_forward.1} parent=0 // pred_check
    _
  $region11: #{lstm_forward.1} parent=0 // pred_check_branch
    %20 = sbr.rel (0) target = $region13
  $region12: #{lstm_forward.1} parent=0 // pred_region
    _
  $region13: #{lstm_forward.1} parent=0 // pred_fallthru
    _
  // Predicated region
  $region14: #{lstm_forward.1} parent=0 // pred_check
    _
  $region15: #{lstm_forward.1} parent=0 // pred_check_branch
    %22 = sbr.rel (0) target = $region17
  $region16: #{lstm_forward.1} parent=0 // pred_region
    _
  $region17: #{lstm_forward.1} parent=0 // pred_fallthru
    _
  // Predicated region
  $region18: #{lstm_forward.1} parent=0 // pred_check
    _
  $region19: #{lstm_forward.1} parent=0 // pred_check_branch
    %24 = sbr.rel (0) target = $region21
  $region20: #{lstm_forward.1} parent=0 // pred_region
    _
  $region21: #{lstm_forward.1} parent=0 // pred_fallthru
    _
  // Predicated region
  $region22: #{lstm_forward.1} parent=0 // pred_check
    _
  $region23: #{lstm_forward.1} parent=0 // pred_check_branch
    %26 = sbr.rel (0) target = $region25
  $region24: #{lstm_forward.1} parent=0 // pred_region
    _
  $region25: #{lstm_forward.1} parent=0 // pred_fallthru
    _
  %v27 = vld [vmem:[%s1] sm:$0x1]
  %v28 = vld [vmem:[%s2] sm:$0xff]
  %v29 = vld [vmem:[%s2 + $0x8] sm:$0xff]
  %v30 = vld [vmem:[%s2 + $0x10] sm:$0xff]
  %v31 = vld [vmem:[%s2 + $0x18] sm:$0xff]
  %v32 = vld [vmem:[%s3] sm:$0x1]
  %vm33 = vcmask 261120
  %34 = vst.msk [vmem:[#allocation2 + $0x40] sm:$0xff] %vm33, 0.0
  %35 = vst.msk [vmem:[#allocation2 + $0x48] sm:$0xff] %vm33, 0.0
  %36 = vst.msk [vmem:[#allocation2 + $0x50] sm:$0xff] %vm33, 0.0
  %37 = vst.msk [vmem:[#allocation2 + $0x58] sm:$0xff] %vm33, 0.0
  %38 = vst.msk [vmem:[#allocation2 + $0x60] sm:$0xff] %vm33, 0.0
  %39 = vst.msk [vmem:[#allocation2 + $0x68] sm:$0xff] %vm33, 0.0
  %40 = vst.msk [vmem:[#allocation2 + $0x70] sm:$0xff] %vm33, 0.0
  %41 = vst.msk [vmem:[#allocation2 + $0x78] sm:$0xff] %vm33, 0.0
  %v42 = vld [vmem:[%s0] sm:$0xff]
  %44 = vset.pattern.permute.xlu0 0
  %45 = vperm.xlu0 %44, %v42
  %v46 = vpop.permute.xlu0 %45
  %v49 = vlaneseq
  %v50 = vshrl.u32 %v49, 7
  %v51 = vsub.s32 0, %v50
  %v52 = vrot.slane %v27, %v51
  %v54 = vmul.f32 %v46, %v52
  %v56 = vlaneseq
  %v57 = vshrl.u32 %v56, 7
  %v58 = vsub.s32 0, %v57
  %v59 = vrot.slane %v32, %v58
  %v61 = vadd.f32 %v54, %v59
  %v63 = vsel %vm33, 0.0, 0
  %65 = vmatprep.subr.mxu0 0.0
  %66 = vmatpush1.msra.mxu0 %v28
  %67 = vmatprep.subr.mxu0 0.0
  %68 = vmatpush1.msra.mxu0 %v29
  %69 = vmatprep.subr.mxu0 0.0
  %70 = vmatpush1.msra.mxu0 %v30
  %71 = vmatprep.subr.mxu0 0.0
  %72 = vmatpush1.msra.mxu0 %v31
  %73 = vmatprep.subr.mxu0 0.0
  %74 = vmatpush1.msra.mxu0 0.0
  %75 = vmatprep.subr.mxu0 0.0
  %76 = vmatpush1.msra.mxu0 0.0
  %77 = vmatprep.subr.mxu0 0.0
  %78 = vmatpush1.msra.mxu0 0.0
  %79 = vmatprep.subr.mxu0 0.0
  %80 = vmatpush1.msra.mxu0 0.0
  %81 = vmatprep.subr.mxu0 0.0
  %82 = vmatpush1.msra.mxu0 0.0
  %83 = vmatprep.subr.mxu0 0.0
  %84 = vmatpush1.msra.mxu0 0.0
  %85 = vmatprep.subr.mxu0 0.0
  %86 = vmatpush1.msra.mxu0 0.0
  %87 = vmatprep.subr.mxu0 0.0
  %88 = vmatpush1.msra.mxu0 0.0
  %89 = vmatprep.subr.mxu0 0.0
  %90 = vmatpush1.msra.mxu0 0.0
  %91 = vmatprep.subr.mxu0 0.0
  %92 = vmatpush1.msra.mxu0 0.0
  %93 = vmatprep.subr.mxu0 0.0
  %94 = vmatpush1.msra.mxu0 0.0
  %95 = vmatprep.subr.mxu0 0.0
  %96 = vmatpush1.msra.mxu0 0.0
  %97 = vmatprep.subr.mxu0 0.0
  %98 = vmatpush1.msra.mxu0 0.0
  %99 = vmatprep.subr.mxu0 0.0
  %100 = vmatpush1.msra.mxu0 0.0
  %101 = vmatprep.subr.mxu0 0.0
  %102 = vmatpush1.msra.mxu0 0.0
  %103 = vmatprep.subr.mxu0 0.0
  %104 = vmatpush1.msra.mxu0 0.0
  %105 = vmatprep.subr.mxu0 0.0
  %106 = vmatpush1.msra.mxu0 0.0
  %107 = vmatprep.subr.mxu0 0.0
  %108 = vmatpush1.msra.mxu0 0.0
  %109 = vmatprep.subr.mxu0 0.0
  %110 = vmatpush1.msra.mxu0 0.0
  %111 = vmatprep.subr.mxu0 0.0
  %112 = vmatpush1.msra.mxu0 0.0
  %113 = vmatprep.subr.mxu0 0.0
  %114 = vmatpush1.msra.mxu0 0.0
  %115 = vmatprep.subr.mxu0 0.0
  %116 = vmatpush1.msra.mxu0 0.0
  %117 = vmatprep.subr.mxu0 0.0
  %118 = vmatpush1.msra.mxu0 0.0
  %119 = vmatprep.subr.mxu0 0.0
  %120 = vmatpush1.msra.mxu0 0.0
  %121 = vmatprep.subr.mxu0 0.0
  %122 = vmatpush1.msra.mxu0 0.0
  %123 = vmatprep.subr.mxu0 0.0
  %124 = vmatpush1.msra.mxu0 0.0
  %125 = vmatprep.subr.mxu0 0.0
  %126 = vmatpush1.msra.mxu0 0.0
  %127 = vmatprep.subr.mxu0 0.0
  %128 = vmatpush1.msra.mxu0 0.0
  %129 = vmatprep.mubr.f32.mxu0 0.0
  %130 = vmatmul.mubr.f32.gmra.mrb[0].mxu0 %v63
  %v131 = vpop.f32.mrb[0].mxu0
  %v132 = vadd.f32 0.0, %v131
  %v133 = vpop.f32.mrb[0].mxu0
  %134 = vdwg.mxu0
  %v135 = vadd.f32 %v61, %v132
  %v136 = vmul.f32 %v135, 0.5
  %v137 = vtanh.pop %v136
  %v138 = vmul.f32 %v137, 0.5
  %v139 = vadd.f32 %v138, 0.5
  %v140 = vtanh.pop %v135
  %v141 = vmul.f32 %v139, 0.0
  %143 = vrot.lane.b32.xlu0 %v140, 64
  %v144 = vpop.permute.xlu0 %143
  %v146 = vmul.f32 %v139, %v144
  %148 = vrot.lane.b32.xlu0 %v146, 32
  %v149 = vpop.permute.xlu0 %148
  %v151 = vadd.f32 %v141, %v149
  %v152 = vtanh.pop %v151
  %154 = vrot.lane.b32.xlu0 %v152, 64
  %v155 = vpop.permute.xlu0 %154
  %v157 = vmul.f32 %v139, %v155
  %159 = vrot.lane.b32.xlu0 %v157, 32
  %v160 = vpop.permute.xlu0 %159
  %162 = vst.msk [vmem:[#allocation2] sm:$0xff] %vm33, %v160
  %s163 = scalar_lea.vmem %s0, 8
  %v164 = vld [vmem:[%s163] sm:$0xff]
  %166 = vset.pattern.permute.xlu0 0
  %167 = vperm.xlu0 %166, %v164
  %v168 = vpop.permute.xlu0 %167
  %v170 = vmul.f32 %v168, %v52
  %v171 = vadd.f32 %v170, %v59
  %v172 = vsel %vm33, %v160, 0
  %174 = vmatprep.subr.mxu0 0.0
  %175 = vmatpush1.msra.mxu0 %v28
  %176 = vmatprep.subr.mxu0 0.0
  %177 = vmatpush1.msra.mxu0 %v29
  %178 = vmatprep.subr.mxu0 0.0
  %179 = vmatpush1.msra.mxu0 %v30
  %180 = vmatprep.subr.mxu0 0.0
  %181 = vmatpush1.msra.mxu0 %v31
  %182 = vmatprep.subr.mxu0 0.0
  %183 = vmatpush1.msra.mxu0 0.0
  %184 = vmatprep.subr.mxu0 0.0
  %185 = vmatpush1.msra.mxu0 0.0
  %186 = vmatprep.subr.mxu0 0.0
  %187 = vmatpush1.msra.mxu0 0.0
  %188 = vmatprep.subr.mxu0 0.0
  %189 = vmatpush1.msra.mxu0 0.0
  %190 = vmatprep.subr.mxu0 0.0
  %191 = vmatpush1.msra.mxu0 0.0
  %192 = vmatprep.subr.mxu0 0.0
  %193 = vmatpush1.msra.mxu0 0.0
  %194 = vmatprep.subr.mxu0 0.0
  %195 = vmatpush1.msra.mxu0 0.0
  %196 = vmatprep.subr.mxu0 0.0
  %197 = vmatpush1.msra.mxu0 0.0
  %198 = vmatprep.subr.mxu0 0.0
  %199 = vmatpush1.msra.mxu0 0.0
  %200 = vmatprep.subr.mxu0 0.0
  %201 = vmatpush1.msra.mxu0 0.0
  %202 = vmatprep.subr.mxu0 0.0
  %203 = vmatpush1.msra.mxu0 0.0
  %204 = vmatprep.subr.mxu0 0.0
  %205 = vmatpush1.msra.mxu0 0.0
  %206 = vmatprep.subr.mxu0 0.0
  %207 = vmatpush1.msra.mxu0 0.0
  %208 = vmatprep.subr.mxu0 0.0
  %209 = vmatpush1.msra.mxu0 0.0
  %210 = vmatprep.subr.mxu0 0.0
  %211 = vmatpush1.msra.mxu0 0.0
  %212 = vmatprep.subr.mxu0 0.0
  %213 = vmatpush1.msra.mxu0 0.0
  %214 = vmatprep.subr.mxu0 0.0
  %215 = vmatpush1.msra.mxu0 0.0
  %216 = vmatprep.subr.mxu0 0.0
  %217 = vmatpush1.msra.mxu0 0.0
  %218 = vmatprep.subr.mxu0 0.0
  %219 = vmatpush1.msra.mxu0 0.0
  %220 = vmatprep.subr.mxu0 0.0
  %221 = vmatpush1.msra.mxu0 0.0
  %222 = vmatprep.subr.mxu0 0.0
  %223 = vmatpush1.msra.mxu0 0.0
  %224 = vmatprep.subr.mxu0 0.0
  %225 = vmatpush1.msra.mxu0 0.0
  %226 = vmatprep.subr.mxu0 0.0
  %227 = vmatpush1.msra.mxu0 0.0
  %228 = vmatprep.subr.mxu0 0.0
  %229 = vmatpush1.msra.mxu0 0.0
  %230 = vmatprep.subr.mxu0 0.0
  %231 = vmatpush1.msra.mxu0 0.0
  %232 = vmatprep.subr.mxu0 0.0
  %233 = vmatpush1.msra.mxu0 0.0
  %234 = vmatprep.subr.mxu0 0.0
  %235 = vmatpush1.msra.mxu0 0.0
  %236 = vmatprep.subr.mxu0 0.0
  %237 = vmatpush1.msra.mxu0 0.0
  %238 = vmatprep.mubr.f32.mxu0 0.0
  %239 = vmatmul.mubr.f32.gmra.mrb[0].mxu0 %v172
  %v240 = vpop.f32.mrb[0].mxu0
  %v241 = vadd.f32 0.0, %v240
  %v242 = vpop.f32.mrb[0].mxu0
  %243 = vdwg.mxu0
  %v244 = vadd.f32 %v171, %v241
  %v245 = vmul.f32 %v244, 0.5
  %v246 = vtanh.pop %v245
  %v247 = vmul.f32 %v246, 0.5
  %v248 = vadd.f32 %v247, 0.5
  %v249 = vtanh.pop %v244
  %v250 = vmul.f32 %v248, %v151
  %252 = vrot.lane.b32.xlu0 %v249, 64
  %v253 = vpop.permute.xlu0 %252
  %v255 = vmul.f32 %v248, %v253
  %257 = vrot.lane.b32.xlu0 %v255, 32
  %v258 = vpop.permute.xlu0 %257
  %v260 = vadd.f32 %v250, %v258
  %v261 = vtanh.pop %v260
  %263 = vrot.lane.b32.xlu0 %v261, 64
  %v264 = vpop.permute.xlu0 %263
  %v266 = vmul.f32 %v248, %v264
  %268 = vrot.lane.b32.xlu0 %v266, 32
  %v269 = vpop.permute.xlu0 %268
  %s271 = scalar_lea.vmem [#allocation2], 8
  %272 = vst.msk [vmem:[%s271] sm:$0xff] %vm33, %v269
  %s273 = scalar_lea.vmem %s0, 16
  %v274 = vld [vmem:[%s273] sm:$0xff]
  %276 = vset.pattern.permute.xlu0 0
  %277 = vperm.xlu0 %276, %v274
  %v278 = vpop.permute.xlu0 %277
  %v280 = vmul.f32 %v278, %v52
  %v281 = vadd.f32 %v280, %v59
  %v282 = vsel %vm33, %v269, 0
  %284 = vmatprep.subr.mxu0 0.0
  %285 = vmatpush1.msra.mxu0 %v28
  %286 = vmatprep.subr.mxu0 0.0
  %287 = vmatpush1.msra.mxu0 %v29
  %288 = vmatprep.subr.mxu0 0.0
  %289 = vmatpush1.msra.mxu0 %v30
  %290 = vmatprep.subr.mxu0 0.0
  %291 = vmatpush1.msra.mxu0 %v31
  %292 = vmatprep.subr.mxu0 0.0
  %293 = vmatpush1.msra.mxu0 0.0
  %294 = vmatprep.subr.mxu0 0.0
  %295 = vmatpush1.msra.mxu0 0.0
  %296 = vmatprep.subr.mxu0 0.0
  %297 = vmatpush1.msra.mxu0 0.0
  %298 = vmatprep.subr.mxu0 0.0
  %299 = vmatpush1.msra.mxu0 0.0
  %300 = vmatprep.subr.mxu0 0.0
  %301 = vmatpush1.msra.mxu0 0.0
  %302 = vmatprep.subr.mxu0 0.0
  %303 = vmatpush1.msra.mxu0 0.0
  %304 = vmatprep.subr.mxu0 0.0
  %305 = vmatpush1.msra.mxu0 0.0
  %306 = vmatprep.subr.mxu0 0.0
  %307 = vmatpush1.msra.mxu0 0.0
  %308 = vmatprep.subr.mxu0 0.0
  %309 = vmatpush1.msra.mxu0 0.0
  %310 = vmatprep.subr.mxu0 0.0
  %311 = vmatpush1.msra.mxu0 0.0
  %312 = vmatprep.subr.mxu0 0.0
  %313 = vmatpush1.msra.mxu0 0.0
  %314 = vmatprep.subr.mxu0 0.0
  %315 = vmatpush1.msra.mxu0 0.0
  %316 = vmatprep.subr.mxu0 0.0
  %317 = vmatpush1.msra.mxu0 0.0
  %318 = vmatprep.subr.mxu0 0.0
  %319 = vmatpush1.msra.mxu0 0.0
  %320 = vmatprep.subr.mxu0 0.0
  %321 = vmatpush1.msra.mxu0 0.0
  %322 = vmatprep.subr.mxu0 0.0
  %323 = vmatpush1.msra.mxu0 0.0
  %324 = vmatprep.subr.mxu0 0.0
  %325 = vmatpush1.msra.mxu0 0.0
  %326 = vmatprep.subr.mxu0 0.0
  %327 = vmatpush1.msra.mxu0 0.0
  %328 = vmatprep.subr.mxu0 0.0
  %329 = vmatpush1.msra.mxu0 0.0
  %330 = vmatprep.subr.mxu0 0.0
  %331 = vmatpush1.msra.mxu0 0.0
  %332 = vmatprep.subr.mxu0 0.0
  %333 = vmatpush1.msra.mxu0 0.0
  %334 = vmatprep.subr.mxu0 0.0
  %335 = vmatpush1.msra.mxu0 0.0
  %336 = vmatprep.subr.mxu0 0.0
  %337 = vmatpush1.msra.mxu0 0.0
  %338 = vmatprep.subr.mxu0 0.0
  %339 = vmatpush1.msra.mxu0 0.0
  %340 = vmatprep.subr.mxu0 0.0
  %341 = vmatpush1.msra.mxu0 0.0
  %342 = vmatprep.subr.mxu0 0.0
  %343 = vmatpush1.msra.mxu0 0.0
  %344 = vmatprep.subr.mxu0 0.0
  %345 = vmatpush1.msra.mxu0 0.0
  %346 = vmatprep.subr.mxu0 0.0
  %347 = vmatpush1.msra.mxu0 0.0
  %348 = vmatprep.mubr.f32.mxu0 0.0
  %349 = vmatmul.mubr.f32.gmra.mrb[0].mxu0 %v282
  %v350 = vpop.f32.mrb[0].mxu0
  %v351 = vadd.f32 0.0, %v350
  %v352 = vpop.f32.mrb[0].mxu0
  %353 = vdwg.mxu0
  %v354 = vadd.f32 %v281, %v351
  %v355 = vmul.f32 %v354, 0.5
  %v356 = vtanh.pop %v355
  %v357 = vmul.f32 %v356, 0.5
  %v358 = vadd.f32 %v357, 0.5
  %v359 = vtanh.pop %v354
  %v360 = vmul.f32 %v358, %v260
  %362 = vrot.lane.b32.xlu0 %v359, 64
  %v363 = vpop.permute.xlu0 %362
  %v365 = vmul.f32 %v358, %v363
  %367 = vrot.lane.b32.xlu0 %v365, 32
  %v368 = vpop.permute.xlu0 %367
  %v370 = vadd.f32 %v360, %v368
  %v371 = vtanh.pop %v370
  %373 = vrot.lane.b32.xlu0 %v371, 64
  %v374 = vpop.permute.xlu0 %373
  %v376 = vmul.f32 %v358, %v374
  %378 = vrot.lane.b32.xlu0 %v376, 32
  %v379 = vpop.permute.xlu0 %378
  %s381 = scalar_lea.vmem [#allocation2], 16
  %382 = vst.msk [vmem:[%s381] sm:$0xff] %vm33, %v379
  %s383 = scalar_lea.vmem %s0, 24
  %v384 = vld [vmem:[%s383] sm:$0xff]
  %386 = vset.pattern.permute.xlu0 0
  %387 = vperm.xlu0 %386, %v384
  %v388 = vpop.permute.xlu0 %387
  %v390 = vmul.f32 %v388, %v52
  %v391 = vadd.f32 %v390, %v59
  %v392 = vsel %vm33, %v379, 0
  %394 = vmatprep.subr.mxu0 0.0
  %395 = vmatpush1.msra.mxu0 %v28
  %396 = vmatprep.subr.mxu0 0.0
  %397 = vmatpush1.msra.mxu0 %v29
  %398 = vmatprep.subr.mxu0 0.0
  %399 = vmatpush1.msra.mxu0 %v30
  %400 = vmatprep.subr.mxu0 0.0
  %401 = vmatpush1.msra.mxu0 %v31
  %402 = vmatprep.subr.mxu0 0.0
  %403 = vmatpush1.msra.mxu0 0.0
  %404 = vmatprep.subr.mxu0 0.0
  %405 = vmatpush1.msra.mxu0 0.0
  %406 = vmatprep.subr.mxu0 0.0
  %407 = vmatpush1.msra.mxu0 0.0
  %408 = vmatprep.subr.mxu0 0.0
  %409 = vmatpush1.msra.mxu0 0.0
  %410 = vmatprep.subr.mxu0 0.0
  %411 = vmatpush1.msra.mxu0 0.0
  %412 = vmatprep.subr.mxu0 0.0
  %413 = vmatpush1.msra.mxu0 0.0
  %414 = vmatprep.subr.mxu0 0.0
  %415 = vmatpush1.msra.mxu0 0.0
  %416 = vmatprep.subr.mxu0 0.0
  %417 = vmatpush1.msra.mxu0 0.0
  %418 = vmatprep.subr.mxu0 0.0
  %419 = vmatpush1.msra.mxu0 0.0
  %420 = vmatprep.subr.mxu0 0.0
  %421 = vmatpush1.msra.mxu0 0.0
  %422 = vmatprep.subr.mxu0 0.0
  %423 = vmatpush1.msra.mxu0 0.0
  %424 = vmatprep.subr.mxu0 0.0
  %425 = vmatpush1.msra.mxu0 0.0
  %426 = vmatprep.subr.mxu0 0.0
  %427 = vmatpush1.msra.mxu0 0.0
  %428 = vmatprep.subr.mxu0 0.0
  %429 = vmatpush1.msra.mxu0 0.0
  %430 = vmatprep.subr.mxu0 0.0
  %431 = vmatpush1.msra.mxu0 0.0
  %432 = vmatprep.subr.mxu0 0.0
  %433 = vmatpush1.msra.mxu0 0.0
  %434 = vmatprep.subr.mxu0 0.0
  %435 = vmatpush1.msra.mxu0 0.0
  %436 = vmatprep.subr.mxu0 0.0
  %437 = vmatpush1.msra.mxu0 0.0
  %438 = vmatprep.subr.mxu0 0.0
  %439 = vmatpush1.msra.mxu0 0.0
  %440 = vmatprep.subr.mxu0 0.0
  %441 = vmatpush1.msra.mxu0 0.0
  %442 = vmatprep.subr.mxu0 0.0
  %443 = vmatpush1.msra.mxu0 0.0
  %444 = vmatprep.subr.mxu0 0.0
  %445 = vmatpush1.msra.mxu0 0.0
  %446 = vmatprep.subr.mxu0 0.0
  %447 = vmatpush1.msra.mxu0 0.0
  %448 = vmatprep.subr.mxu0 0.0
  %449 = vmatpush1.msra.mxu0 0.0
  %450 = vmatprep.subr.mxu0 0.0
  %451 = vmatpush1.msra.mxu0 0.0
  %452 = vmatprep.subr.mxu0 0.0
  %453 = vmatpush1.msra.mxu0 0.0
  %454 = vmatprep.subr.mxu0 0.0
  %455 = vmatpush1.msra.mxu0 0.0
  %456 = vmatprep.subr.mxu0 0.0
  %457 = vmatpush1.msra.mxu0 0.0
  %458 = vmatprep.mubr.f32.mxu0 0.0
  %459 = vmatmul.mubr.f32.gmra.mrb[0].mxu0 %v392
  %v460 = vpop.f32.mrb[0].mxu0
  %v461 = vadd.f32 0.0, %v460
  %v462 = vpop.f32.mrb[0].mxu0
  %463 = vdwg.mxu0
  %v464 = vadd.f32 %v391, %v461
  %v465 = vmul.f32 %v464, 0.5
  %v466 = vtanh.pop %v465
  %v467 = vmul.f32 %v466, 0.5
  %v468 = vadd.f32 %v467, 0.5
  %v469 = vtanh.pop %v464
  %v470 = vmul.f32 %v468, %v370
  %472 = vrot.lane.b32.xlu0 %v469, 64
  %v473 = vpop.permute.xlu0 %472
  %v475 = vmul.f32 %v468, %v473
  %477 = vrot.lane.b32.xlu0 %v475, 32
  %v478 = vpop.permute.xlu0 %477
  %v480 = vadd.f32 %v470, %v478
  %v481 = vtanh.pop %v480
  %483 = vrot.lane.b32.xlu0 %v481, 64
  %v484 = vpop.permute.xlu0 %483
  %v486 = vmul.f32 %v468, %v484
  %488 = vrot.lane.b32.xlu0 %v486, 32
  %v489 = vpop.permute.xlu0 %488
  %s491 = scalar_lea.vmem [#allocation2], 24
  %492 = vst.msk [vmem:[%s491] sm:$0xff] %vm33, %v489
  %s493 = scalar_lea.vmem %s0, 32
  %v494 = vld [vmem:[%s493] sm:$0xff]
  %496 = vset.pattern.permute.xlu0 0
  %497 = vperm.xlu0 %496, %v494
  %v498 = vpop.permute.xlu0 %497
  %v500 = vmul.f32 %v498, %v52
  %v501 = vadd.f32 %v500, %v59
  %v502 = vsel %vm33, %v489, 0
  %504 = vmatprep.subr.mxu0 0.0
  %505 = vmatpush1.msra.mxu0 %v28
  %506 = vmatprep.subr.mxu0 0.0
  %507 = vmatpush1.msra.mxu0 %v29
  %508 = vmatprep.subr.mxu0 0.0
  %509 = vmatpush1.msra.mxu0 %v30
  %510 = vmatprep.subr.mxu0 0.0
  %511 = vmatpush1.msra.mxu0 %v31
  %512 = vmatprep.subr.mxu0 0.0
  %513 = vmatpush1.msra.mxu0 0.0
  %514 = vmatprep.subr.mxu0 0.0
  %515 = vmatpush1.msra.mxu0 0.0
  %516 = vmatprep.subr.mxu0 0.0
  %517 = vmatpush1.msra.mxu0 0.0
  %518 = vmatprep.subr.mxu0 0.0
  %519 = vmatpush1.msra.mxu0 0.0
  %520 = vmatprep.subr.mxu0 0.0
  %521 = vmatpush1.msra.mxu0 0.0
  %522 = vmatprep.subr.mxu0 0.0
  %523 = vmatpush1.msra.mxu0 0.0
  %524 = vmatprep.subr.mxu0 0.0
  %525 = vmatpush1.msra.mxu0 0.0
  %526 = vmatprep.subr.mxu0 0.0
  %527 = vmatpush1.msra.mxu0 0.0
  %528 = vmatprep.subr.mxu0 0.0
  %529 = vmatpush1.msra.mxu0 0.0
  %530 = vmatprep.subr.mxu0 0.0
  %531 = vmatpush1.msra.mxu0 0.0
  %532 = vmatprep.subr.mxu0 0.0
  %533 = vmatpush1.msra.mxu0 0.0
  %534 = vmatprep.subr.mxu0 0.0
  %535 = vmatpush1.msra.mxu0 0.0
  %536 = vmatprep.subr.mxu0 0.0
  %537 = vmatpush1.msra.mxu0 0.0
  %538 = vmatprep.subr.mxu0 0.0
  %539 = vmatpush1.msra.mxu0 0.0
  %540 = vmatprep.subr.mxu0 0.0
  %541 = vmatpush1.msra.mxu0 0.0
  %542 = vmatprep.subr.mxu0 0.0
  %543 = vmatpush1.msra.mxu0 0.0
  %544 = vmatprep.subr.mxu0 0.0
  %545 = vmatpush1.msra.mxu0 0.0
  %546 = vmatprep.subr.mxu0 0.0
  %547 = vmatpush1.msra.mxu0 0.0
  %548 = vmatprep.subr.mxu0 0.0
  %549 = vmatpush1.msra.mxu0 0.0
  %550 = vmatprep.subr.mxu0 0.0
  %551 = vmatpush1.msra.mxu0 0.0
  %552 = vmatprep.subr.mxu0 0.0
  %553 = vmatpush1.msra.mxu0 0.0
  %554 = vmatprep.subr.mxu0 0.0
  %555 = vmatpush1.msra.mxu0 0.0
  %556 = vmatprep.subr.mxu0 0.0
  %557 = vmatpush1.msra.mxu0 0.0
  %558 = vmatprep.subr.mxu0 0.0
  %559 = vmatpush1.msra.mxu0 0.0
  %560 = vmatprep.subr.mxu0 0.0
  %561 = vmatpush1.msra.mxu0 0.0
  %562 = vmatprep.subr.mxu0 0.0
  %563 = vmatpush1.msra.mxu0 0.0
  %564 = vmatprep.subr.mxu0 0.0
  %565 = vmatpush1.msra.mxu0 0.0
  %566 = vmatprep.subr.mxu0 0.0
  %567 = vmatpush1.msra.mxu0 0.0
  %568 = vmatprep.mubr.f32.mxu0 0.0
  %569 = vmatmul.mubr.f32.gmra.mrb[0].mxu0 %v502
  %v570 = vpop.f32.mrb[0].mxu0
  %v571 = vadd.f32 0.0, %v570
  %v572 = vpop.f32.mrb[0].mxu0
  %573 = vdwg.mxu0
  %v574 = vadd.f32 %v501, %v571
  %v575 = vmul.f32 %v574, 0.5
  %v576 = vtanh.pop %v575
  %v577 = vmul.f32 %v576, 0.5
  %v578 = vadd.f32 %v577, 0.5
  %v579 = vtanh.pop %v574
  %v580 = vmul.f32 %v578, %v480
  %582 = vrot.lane.b32.xlu0 %v579, 64
  %v583 = vpop.permute.xlu0 %582
  %v585 = vmul.f32 %v578, %v583
  %587 = vrot.lane.b32.xlu0 %v585, 32
  %v588 = vpop.permute.xlu0 %587
  %v590 = vadd.f32 %v580, %v588
  %v591 = vtanh.pop %v590
  %593 = vrot.lane.b32.xlu0 %v591, 64
  %v594 = vpop.permute.xlu0 %593
  %v596 = vmul.f32 %v578, %v594
  %598 = vrot.lane.b32.xlu0 %v596, 32
  %v599 = vpop.permute.xlu0 %598
  %s601 = scalar_lea.vmem [#allocation2], 32
  %602 = vst.msk [vmem:[%s601] sm:$0xff] %vm33, %v599
  %s603 = scalar_lea.vmem %s0, 40
  %v604 = vld [vmem:[%s603] sm:$0xff]
  %606 = vset.pattern.permute.xlu0 0
  %607 = vperm.xlu0 %606, %v604
  %v608 = vpop.permute.xlu0 %607
  %v610 = vmul.f32 %v608, %v52
  %v611 = vadd.f32 %v610, %v59
  %v612 = vsel %vm33, %v599, 0
  %614 = vmatprep.subr.mxu0 0.0
  %615 = vmatpush1.msra.mxu0 %v28
  %616 = vmatprep.subr.mxu0 0.0
  %617 = vmatpush1.msra.mxu0 %v29
  %618 = vmatprep.subr.mxu0 0.0
  %619 = vmatpush1.msra.mxu0 %v30
  %620 = vmatprep.subr.mxu0 0.0
  %621 = vmatpush1.msra.mxu0 %v31
  %622 = vmatprep.subr.mxu0 0.0
  %623 = vmatpush1.msra.mxu0 0.0
  %624 = vmatprep.subr.mxu0 0.0
  %625 = vmatpush1.msra.mxu0 0.0
  %626 = vmatprep.subr.mxu0 0.0
  %627 = vmatpush1.msra.mxu0 0.0
  %628 = vmatprep.subr.mxu0 0.0
  %629 = vmatpush1.msra.mxu0 0.0
  %630 = vmatprep.subr.mxu0 0.0
  %631 = vmatpush1.msra.mxu0 0.0
  %632 = vmatprep.subr.mxu0 0.0
  %633 = vmatpush1.msra.mxu0 0.0
  %634 = vmatprep.subr.mxu0 0.0
  %635 = vmatpush1.msra.mxu0 0.0
  %636 = vmatprep.subr.mxu0 0.0
  %637 = vmatpush1.msra.mxu0 0.0
  %638 = vmatprep.subr.mxu0 0.0
  %639 = vmatpush1.msra.mxu0 0.0
  %640 = vmatprep.subr.mxu0 0.0
  %641 = vmatpush1.msra.mxu0 0.0
  %642 = vmatprep.subr.mxu0 0.0
  %643 = vmatpush1.msra.mxu0 0.0
  %644 = vmatprep.subr.mxu0 0.0
  %645 = vmatpush1.msra.mxu0 0.0
  %646 = vmatprep.subr.mxu0 0.0
  %647 = vmatpush1.msra.mxu0 0.0
  %648 = vmatprep.subr.mxu0 0.0
  %649 = vmatpush1.msra.mxu0 0.0
  %650 = vmatprep.subr.mxu0 0.0
  %651 = vmatpush1.msra.mxu0 0.0
  %652 = vmatprep.subr.mxu0 0.0
  %653 = vmatpush1.msra.mxu0 0.0
  %654 = vmatprep.subr.mxu0 0.0
  %655 = vmatpush1.msra.mxu0 0.0
  %656 = vmatprep.subr.mxu0 0.0
  %657 = vmatpush1.msra.mxu0 0.0
  %658 = vmatprep.subr.mxu0 0.0
  %659 = vmatpush1.msra.mxu0 0.0
  %660 = vmatprep.subr.mxu0 0.0
  %661 = vmatpush1.msra.mxu0 0.0
  %662 = vmatprep.subr.mxu0 0.0
  %663 = vmatpush1.msra.mxu0 0.0
  %664 = vmatprep.subr.mxu0 0.0
  %665 = vmatpush1.msra.mxu0 0.0
  %666 = vmatprep.subr.mxu0 0.0
  %667 = vmatpush1.msra.mxu0 0.0
  %668 = vmatprep.subr.mxu0 0.0
  %669 = vmatpush1.msra.mxu0 0.0
  %670 = vmatprep.subr.mxu0 0.0
  %671 = vmatpush1.msra.mxu0 0.0
  %672 = vmatprep.subr.mxu0 0.0
  %673 = vmatpush1.msra.mxu0 0.0
  %674 = vmatprep.subr.mxu0 0.0
  %675 = vmatpush1.msra.mxu0 0.0
  %676 = vmatprep.subr.mxu0 0.0
  %677 = vmatpush1.msra.mxu0 0.0
  %678 = vmatprep.mubr.f32.mxu0 0.0
  %679 = vmatmul.mubr.f32.gmra.mrb[0].mxu0 %v612
  %v680 = vpop.f32.mrb[0].mxu0
  %v681 = vadd.f32 0.0, %v680
  %v682 = vpop.f32.mrb[0].mxu0
  %683 = vdwg.mxu0
  %v684 = vadd.f32 %v611, %v681
  %v685 = vmul.f32 %v684, 0.5
  %v686 = vtanh.pop %v685
  %v687 = vmul.f32 %v686, 0.5
  %v688 = vadd.f32 %v687, 0.5
  %v689 = vtanh.pop %v684
  %v690 = vmul.f32 %v688, %v590
  %692 = vrot.lane.b32.xlu0 %v689, 64
  %v693 = vpop.permute.xlu0 %692
  %v695 = vmul.f32 %v688, %v693
  %697 = vrot.lane.b32.xlu0 %v695, 32
  %v698 = vpop.permute.xlu0 %697
  %v700 = vadd.f32 %v690, %v698
  %v701 = vtanh.pop %v700
  %703 = vrot.lane.b32.xlu0 %v701, 64
  %v704 = vpop.permute.xlu0 %703
  %v706 = vmul.f32 %v688, %v704
  %708 = vrot.lane.b32.xlu0 %v706, 32
  %v709 = vpop.permute.xlu0 %708
  %s711 = scalar_lea.vmem [#allocation2], 40
  %712 = vst.msk [vmem:[%s711] sm:$0xff] %vm33, %v709
  %s713 = scalar_lea.vmem %s0, 48
  %v714 = vld [vmem:[%s713] sm:$0xff]
  %716 = vset.pattern.permute.xlu0 0
  %717 = vperm.xlu0 %716, %v714
  %v718 = vpop.permute.xlu0 %717
  %v720 = vmul.f32 %v718, %v52
  %v721 = vadd.f32 %v720, %v59
  %v722 = vsel %vm33, %v709, 0
  %724 = vmatprep.subr.mxu0 0.0
  %725 = vmatpush1.msra.mxu0 %v28
  %726 = vmatprep.subr.mxu0 0.0
  %727 = vmatpush1.msra.mxu0 %v29
  %728 = vmatprep.subr.mxu0 0.0
  %729 = vmatpush1.msra.mxu0 %v30
  %730 = vmatprep.subr.mxu0 0.0
  %731 = vmatpush1.msra.mxu0 %v31
  %732 = vmatprep.subr.mxu0 0.0
  %733 = vmatpush1.msra.mxu0 0.0
  %734 = vmatprep.subr.mxu0 0.0
  %735 = vmatpush1.msra.mxu0 0.0
  %736 = vmatprep.subr.mxu0 0.0
  %737 = vmatpush1.msra.mxu0 0.0
  %738 = vmatprep.subr.mxu0 0.0
  %739 = vmatpush1.msra.mxu0 0.0
  %740 = vmatprep.subr.mxu0 0.0
  %741 = vmatpush1.msra.mxu0 0.0
  %742 = vmatprep.subr.mxu0 0.0
  %743 = vmatpush1.msra.mxu0 0.0
  %744 = vmatprep.subr.mxu0 0.0
  %745 = vmatpush1.msra.mxu0 0.0
  %746 = vmatprep.subr.mxu0 0.0
  %747 = vmatpush1.msra.mxu0 0.0
  %748 = vmatprep.subr.mxu0 0.0
  %749 = vmatpush1.msra.mxu0 0.0
  %750 = vmatprep.subr.mxu0 0.0
  %751 = vmatpush1.msra.mxu0 0.0
  %752 = vmatprep.subr.mxu0 0.0
  %753 = vmatpush1.msra.mxu0 0.0
  %754 = vmatprep.subr.mxu0 0.0
  %755 = vmatpush1.msra.mxu0 0.0
  %756 = vmatprep.subr.mxu0 0.0
  %757 = vmatpush1.msra.mxu0 0.0
  %758 = vmatprep.subr.mxu0 0.0
  %759 = vmatpush1.msra.mxu0 0.0
  %760 = vmatprep.subr.mxu0 0.0
  %761 = vmatpush1.msra.mxu0 0.0
  %762 = vmatprep.subr.mxu0 0.0
  %763 = vmatpush1.msra.mxu0 0.0
  %764 = vmatprep.subr.mxu0 0.0
  %765 = vmatpush1.msra.mxu0 0.0
  %766 = vmatprep.subr.mxu0 0.0
  %767 = vmatpush1.msra.mxu0 0.0
  %768 = vmatprep.subr.mxu0 0.0
  %769 = vmatpush1.msra.mxu0 0.0
  %770 = vmatprep.subr.mxu0 0.0
  %771 = vmatpush1.msra.mxu0 0.0
  %772 = vmatprep.subr.mxu0 0.0
  %773 = vmatpush1.msra.mxu0 0.0
  %774 = vmatprep.subr.mxu0 0.0
  %775 = vmatpush1.msra.mxu0 0.0
  %776 = vmatprep.subr.mxu0 0.0
  %777 = vmatpush1.msra.mxu0 0.0
  %778 = vmatprep.subr.mxu0 0.0
  %779 = vmatpush1.msra.mxu0 0.0
  %780 = vmatprep.subr.mxu0 0.0
  %781 = vmatpush1.msra.mxu0 0.0
  %782 = vmatprep.subr.mxu0 0.0
  %783 = vmatpush1.msra.mxu0 0.0
  %784 = vmatprep.subr.mxu0 0.0
  %785 = vmatpush1.msra.mxu0 0.0
  %786 = vmatprep.subr.mxu0 0.0
  %787 = vmatpush1.msra.mxu0 0.0
  %788 = vmatprep.mubr.f32.mxu0 0.0
  %789 = vmatmul.mubr.f32.gmra.mrb[0].mxu0 %v722
  %v790 = vpop.f32.mrb[0].mxu0
  %v791 = vadd.f32 0.0, %v790
  %v792 = vpop.f32.mrb[0].mxu0
  %793 = vdwg.mxu0
  %v794 = vadd.f32 %v721, %v791
  %v795 = vmul.f32 %v794, 0.5
  %v796 = vtanh.pop %v795
  %v797 = vmul.f32 %v796, 0.5
  %v798 = vadd.f32 %v797, 0.5
  %v799 = vtanh.pop %v794
  %v800 = vmul.f32 %v798, %v700
  %802 = vrot.lane.b32.xlu0 %v799, 64
  %v803 = vpop.permute.xlu0 %802
  %v805 = vmul.f32 %v798, %v803
  %807 = vrot.lane.b32.xlu0 %v805, 32
  %v808 = vpop.permute.xlu0 %807
  %v810 = vadd.f32 %v800, %v808
  %v811 = vtanh.pop %v810
  %813 = vrot.lane.b32.xlu0 %v811, 64
  %v814 = vpop.permute.xlu0 %813
  %v816 = vmul.f32 %v798, %v814
  %818 = vrot.lane.b32.xlu0 %v816, 32
  %v819 = vpop.permute.xlu0 %818
  %s821 = scalar_lea.vmem [#allocation2], 48
  %822 = vst.msk [vmem:[%s821] sm:$0xff] %vm33, %v819
  %s823 = scalar_lea.vmem %s0, 56
  %v824 = vld [vmem:[%s823] sm:$0xff]
  %826 = vset.pattern.permute.xlu0 0
  %827 = vperm.xlu0 %826, %v824
  %v828 = vpop.permute.xlu0 %827
  %v830 = vmul.f32 %v828, %v52
  %v831 = vadd.f32 %v830, %v59
  %v832 = vsel %vm33, %v819, 0
  %834 = vmatprep.subr.mxu0 0.0
  %835 = vmatpush1.msra.mxu0 %v28
  %836 = vmatprep.subr.mxu0 0.0
  %837 = vmatpush1.msra.mxu0 %v29
  %838 = vmatprep.subr.mxu0 0.0
  %839 = vmatpush1.msra.mxu0 %v30
  %840 = vmatprep.subr.mxu0 0.0
  %841 = vmatpush1.msra.mxu0 %v31
  %842 = vmatprep.subr.mxu0 0.0
  %843 = vmatpush1.msra.mxu0 0.0
  %844 = vmatprep.subr.mxu0 0.0
  %845 = vmatpush1.msra.mxu0 0.0
  %846 = vmatprep.subr.mxu0 0.0
  %847 = vmatpush1.msra.mxu0 0.0
  %848 = vmatprep.subr.mxu0 0.0
  %849 = vmatpush1.msra.mxu0 0.0
  %850 = vmatprep.subr.mxu0 0.0
  %851 = vmatpush1.msra.mxu0 0.0
  %852 = vmatprep.subr.mxu0 0.0
  %853 = vmatpush1.msra.mxu0 0.0
  %854 = vmatprep.subr.mxu0 0.0
  %855 = vmatpush1.msra.mxu0 0.0
  %856 = vmatprep.subr.mxu0 0.0
  %857 = vmatpush1.msra.mxu0 0.0
  %858 = vmatprep.subr.mxu0 0.0
  %859 = vmatpush1.msra.mxu0 0.0
  %860 = vmatprep.subr.mxu0 0.0
  %861 = vmatpush1.msra.mxu0 0.0
  %862 = vmatprep.subr.mxu0 0.0
  %863 = vmatpush1.msra.mxu0 0.0
  %864 = vmatprep.subr.mxu0 0.0
  %865 = vmatpush1.msra.mxu0 0.0
  %866 = vmatprep.subr.mxu0 0.0
  %867 = vmatpush1.msra.mxu0 0.0
  %868 = vmatprep.subr.mxu0 0.0
  %869 = vmatpush1.msra.mxu0 0.0
  %870 = vmatprep.subr.mxu0 0.0
  %871 = vmatpush1.msra.mxu0 0.0
  %872 = vmatprep.subr.mxu0 0.0
  %873 = vmatpush1.msra.mxu0 0.0
  %874 = vmatprep.subr.mxu0 0.0
  %875 = vmatpush1.msra.mxu0 0.0
  %876 = vmatprep.subr.mxu0 0.0
  %877 = vmatpush1.msra.mxu0 0.0
  %878 = vmatprep.subr.mxu0 0.0
  %879 = vmatpush1.msra.mxu0 0.0
  %880 = vmatprep.subr.mxu0 0.0
  %881 = vmatpush1.msra.mxu0 0.0
  %882 = vmatprep.subr.mxu0 0.0
  %883 = vmatpush1.msra.mxu0 0.0
  %884 = vmatprep.subr.mxu0 0.0
  %885 = vmatpush1.msra.mxu0 0.0
  %886 = vmatprep.subr.mxu0 0.0
  %887 = vmatpush1.msra.mxu0 0.0
  %888 = vmatprep.subr.mxu0 0.0
  %889 = vmatpush1.msra.mxu0 0.0
  %890 = vmatprep.subr.mxu0 0.0
  %891 = vmatpush1.msra.mxu0 0.0
  %892 = vmatprep.subr.mxu0 0.0
  %893 = vmatpush1.msra.mxu0 0.0
  %894 = vmatprep.subr.mxu0 0.0
  %895 = vmatpush1.msra.mxu0 0.0
  %896 = vmatprep.subr.mxu0 0.0
  %897 = vmatpush1.msra.mxu0 0.0
  %898 = vmatprep.mubr.f32.mxu0 0.0
  %899 = vmatmul.mubr.f32.gmra.mrb[0].mxu0 %v832
  %v900 = vpop.f32.mrb[0].mxu0
  %v901 = vadd.f32 0.0, %v900
  %v902 = vpop.f32.mrb[0].mxu0
  %903 = vdwg.mxu0
  %v904 = vadd.f32 %v831, %v901
  %v905 = vmul.f32 %v904, 0.5
  %v906 = vtanh.pop %v905
  %v907 = vmul.f32 %v906, 0.5
  %v908 = vadd.f32 %v907, 0.5
  %v909 = vtanh.pop %v904
  %v910 = vmul.f32 %v908, %v810
  %912 = vrot.lane.b32.xlu0 %v909, 64
  %v913 = vpop.permute.xlu0 %912
  %v915 = vmul.f32 %v908, %v913
  %917 = vrot.lane.b32.xlu0 %v915, 32
  %v918 = vpop.permute.xlu0 %917
  %v920 = vadd.f32 %v910, %v918
  %v921 = vtanh.pop %v920
  %923 = vrot.lane.b32.xlu0 %v921, 64
  %v924 = vpop.permute.xlu0 %923
  %v926 = vmul.f32 %v908, %v924
  %928 = vrot.lane.b32.xlu0 %v926, 32
  %v929 = vpop.permute.xlu0 %928
  %s931 = scalar_lea.vmem [#allocation2], 56
  %932 = vst.msk [vmem:[%s931] sm:$0xff] %vm33, %v929
  %933 = vst.msk [vmem:[%s7] sm:$0xff] %vm33, %v929
  %935 = vrot.lane.b32.xlu0 %v920, 96
  %v936 = vpop.permute.xlu0 %935
  %938 = vst.msk [vmem:[%s8] sm:$0xff] %vm33, %v936
  %v939 = vld [vmem:[%s4] sm:$0x1]
  %v940 = vld [vmem:[#allocation2] sm:$0xff]
  %v941 = vld [vmem:[#allocation2 + $0x8] sm:$0xff]
  %v942 = vld [vmem:[#allocation2 + $0x10] sm:$0xff]
  %v943 = vld [vmem:[#allocation2 + $0x18] sm:$0xff]
  %v944 = vld [vmem:[#allocation2 + $0x20] sm:$0xff]
  %v945 = vld [vmem:[#allocation2 + $0x28] sm:$0xff]
  %v946 = vld [vmem:[#allocation2 + $0x30] sm:$0xff]
  %v947 = vld [vmem:[#allocation2 + $0x38] sm:$0xff]
  %v948 = vld [vmem:[#allocation2 + $0x40] sm:$0xff]
  %v949 = vld [vmem:[#allocation2 + $0x48] sm:$0xff]
  %v950 = vld [vmem:[#allocation2 + $0x50] sm:$0xff]
  %v951 = vld [vmem:[#allocation2 + $0x58] sm:$0xff]
  %v952 = vld [vmem:[#allocation2 + $0x60] sm:$0xff]
  %v953 = vld [vmem:[#allocation2 + $0x68] sm:$0xff]
  %v954 = vld [vmem:[#allocation2 + $0x70] sm:$0xff]
  %v955 = vld [vmem:[#allocation2 + $0x78] sm:$0xff]
  %s956 = sld [smem:[#allocation3]]
  %v957 = vstv %s956
  %v959 = vsel %vm33, %v939, 0
  %v962 = vsel %vm33, %v940, 0
  %v965 = vsel %vm33, %v941, 0
  %v968 = vsel %vm33, %v942, 0
  %v971 = vsel %vm33, %v943, 0
  %v974 = vsel %vm33, %v944, 0
  %v977 = vsel %vm33, %v945, 0
  %v980 = vsel %vm33, %v946, 0
  %v983 = vsel %vm33, %v947, 0
  %v986 = vsel %vm33, %v948, 0
  %v989 = vsel %vm33, %v949, 0
  %v992 = vsel %vm33, %v950, 0
  %v995 = vsel %vm33, %v951, 0
  %v998 = vsel %vm33, %v952, 0
  %v1001 = vsel %vm33, %v953, 0
  %v1004 = vsel %vm33, %v954, 0
  %v1007 = vsel %vm33, %v955, 0
  %1009 = vmatprep.subr.mxu0 0.0
  %1010 = vmatpush1.xpose.msra.mxu0 %v962
  %1011 = vmatprep.subr.mxu0 0.0
  %1012 = vmatpush1.xpose.msra.mxu0 %v965
  %1013 = vmatprep.subr.mxu0 0.0
  %1014 = vmatpush1.xpose.msra.mxu0 %v968
  %1015 = vmatprep.subr.mxu0 0.0
  %1016 = vmatpush1.xpose.msra.mxu0 %v971
  %1017 = vmatprep.subr.mxu0 0.0
  %1018 = vmatpush1.xpose.msra.mxu0 %v974
  %1019 = vmatprep.subr.mxu0 0.0
  %1020 = vmatpush1.xpose.msra.mxu0 %v977
  %1021 = vmatprep.subr.mxu0 0.0
  %1022 = vmatpush1.xpose.msra.mxu0 %v980
  %1023 = vmatprep.subr.mxu0 0.0
  %1024 = vmatpush1.xpose.msra.mxu0 %v983
  %1025 = vmatprep.subr.mxu0 0.0
  %1026 = vmatpush1.xpose.msra.mxu0 %v986
  %1027 = vmatprep.subr.mxu0 0.0
  %1028 = vmatpush1.xpose.msra.mxu0 %v989
  %1029 = vmatprep.subr.mxu0 0.0
  %1030 = vmatpush1.xpose.msra.mxu0 %v992
  %1031 = vmatprep.subr.mxu0 0.0
  %1032 = vmatpush1.xpose.msra.mxu0 %v995
  %1033 = vmatprep.subr.mxu0 0.0
  %1034 = vmatpush1.xpose.msra.mxu0 %v998
  %1035 = vmatprep.subr.mxu0 0.0
  %1036 = vmatpush1.xpose.msra.mxu0 %v1001
  %1037 = vmatprep.subr.mxu0 0.0
  %1038 = vmatpush1.xpose.msra.mxu0 %v1004
  %1039 = vmatprep.subr.mxu0 0.0
  %1040 = vmatpush1.xpose.msra.mxu0 %v1007
  %1041 = vmatprep.subr.mxu0 0.0
  %1042 = vmatpush1.xpose.msra.mxu0 0.0
  %1043 = vmatprep.subr.mxu0 0.0
  %1044 = vmatpush1.xpose.msra.mxu0 0.0
  %1045 = vmatprep.subr.mxu0 0.0
  %1046 = vmatpush1.xpose.msra.mxu0 0.0
  %1047 = vmatprep.subr.mxu0 0.0
  %1048 = vmatpush1.xpose.msra.mxu0 0.0
  %1049 = vmatprep.subr.mxu0 0.0
  %1050 = vmatpush1.xpose.msra.mxu0 0.0
  %1051 = vmatprep.subr.mxu0 0.0
  %1052 = vmatpush1.xpose.msra.mxu0 0.0
  %1053 = vmatprep.subr.mxu0 0.0
  %1054 = vmatpush1.xpose.msra.mxu0 0.0
  %1055 = vmatprep.subr.mxu0 0.0
  %1056 = vmatpush1.xpose.msra.mxu0 0.0
  %1057 = vmatprep.subr.mxu0 0.0
  %1058 = vmatpush1.xpose.msra.mxu0 0.0
  %1059 = vmatprep.subr.mxu0 0.0
  %1060 = vmatpush1.xpose.msra.mxu0 0.0
  %1061 = vmatprep.subr.mxu0 0.0
  %1062 = vmatpush1.xpose.msra.mxu0 0.0
  %1063 = vmatprep.subr.mxu0 0.0
  %1064 = vmatpush1.xpose.msra.mxu0 0.0
  %1065 = vmatprep.subr.mxu0 0.0
  %1066 = vmatpush1.xpose.msra.mxu0 0.0
  %1067 = vmatprep.subr.mxu0 0.0
  %1068 = vmatpush1.xpose.msra.mxu0 0.0
  %1069 = vmatprep.subr.mxu0 0.0
  %1070 = vmatpush1.xpose.msra.mxu0 0.0
  %1071 = vmatprep.subr.mxu0 0.0
  %1072 = vmatpush1.xpose.msra.mxu0 0.0
  %1073 = vmatprep.mubr.f32.mxu0 0.0
  %1074 = vmatmul.mubr.f32.gmra.mrb[0].mxu0 %v959
  %v1075 = vpop.f32.mrb[0].mxu0
  %v1076 = vadd.f32 %v957, %v1075
  %v1077 = vpop.f32.mrb[0].mxu0
  %1078 = vdwg.mxu0
  %1079 = vst [vmem:[%s6] sm:$0x1] %v1076
  // Predicated region
  $region26: #{lstm_forward.1} parent=0 // pred_check
    _
  $region27: #{lstm_forward.1} parent=0 // pred_check_branch
    %1081 = sbr.rel (0) target = $region29
  $region28: #{lstm_forward.1} parent=0 // pred_region
    _
  $region29: #{lstm_forward.1} parent=0 // pred_fallthru
    _
  // Predicated region
  $region30: #{lstm_forward.1} parent=0 // pred_check
    _
  $region31: #{lstm_forward.1} parent=0 // pred_check_branch
    %1083 = sbr.rel (0) target = $region33
  $region32: #{lstm_forward.1} parent=0 // pred_region
    _
  $region33: #{lstm_forward.1} parent=0 // pred_fallthru
    _
  // Predicated region
  $region34: #{lstm_forward.1} parent=0 // pred_check
    _
  $region35: #{lstm_forward.1} parent=0 // pred_check_branch
    %1085 = sbr.rel (0) target = $region37
  $region36: #{lstm_forward.1} parent=0 // pred_region
    _
  $region37: #{lstm_forward.1} parent=0 // pred_fallthru
    _
  // Predicated region
  $region38: #{lstm_forward.1} parent=0 // pred_check
    _
  $region39: #{lstm_forward.1} parent=0 // pred_check_branch
    %1087 = sbr.rel (0) target = $region41
  $region40: #{lstm_forward.1} parent=0 // pred_region
    _
  $region41: #{lstm_forward.1} parent=0 // pred_fallthru
    _
  // Predicated region
  $region42: #{lstm_forward.1} parent=0 // pred_check
    _
  $region43: #{lstm_forward.1} parent=0 // pred_check_branch
    %1089 = sbr.rel (0) target = $region45
  $region44: #{lstm_forward.1} parent=0 // pred_region
    _
  $region45: #{lstm_forward.1} parent=0 // pred_fallthru
    _
  // Predicated region
  $region46: #{lstm_forward.1} parent=0 // pred_check
    _
  $region47: #{lstm_forward.1} parent=0 // pred_check_branch
    %1091 = sbr.rel (0) target = $region49
  $region48: #{lstm_forward.1} parent=0 // pred_region
    _
  $region49: #{lstm_forward.1} parent=0 // pred_fallthru
    _

</llo_original>
